<compile_context>
chip_gen: v6e
topology: v6e:2x2x1
jax: 0.10.0
libtpu: 0.0.40
codegen_flags: <defaults>
</compile_context>

<pallas_src>
import functools

import jax
import jax.numpy as jnp
from jax.experimental import pallas as pl
from jax.experimental.pallas import tpu as pltpu


def _rnn_classify_kernel(ids_ref, emb_ref, wih0_ref, wihr_ref, whh_ref,
                         bias_ref, wc_ref, bc_ref, out_ref,
                         *, num_layers, seq_len, batch, vocab_p1):
    """Fused embedding + multi-layer Elman RNN (relu) + linear classifier.

    ids_ref  : (T*B, 1)            int32 token ids, time-major (row = t*B + b)
    emb_ref  : (V+1, D)            bf16 embedding table
    wih0_ref : (D, H)              bf16 layer-0 input->hidden weight (pre-transposed)
    wihr_ref : (max(L-1,1), H, H)  bf16 layer>=1 input->hidden weights
    whh_ref  : (L, H, H)           bf16 hidden->hidden weights (pre-transposed)
    bias_ref : (L, 1, H)           f32 prefolded biases (b_ih + b_hh)
    wc_ref   : (H, 2)              bf16 classifier weight (pre-transposed)
    bc_ref   : (1, 2)              f32 classifier bias
    out_ref  : (B, T, 2)           f32 logits, batch_first
    """
    T, B = seq_len, batch
    H = whh_ref.shape[-1]
    f32, bf16 = jnp.float32, jnp.bfloat16

    # Hoist all weight/bias loads out of the unrolled loops (loaded once).
    w_hh = [whh_ref[l] for l in range(num_layers)]                    # (H, H) bf16
    w_ih = [wih0_ref[...]] + [wihr_ref[l] for l in range(num_layers - 1)]
    b_l = [bias_ref[l] for l in range(num_layers)]                    # (1, H) f32

    # ---- embedding lookup: exact one-hot matmul, bf16 operands, time-major ---
    # (0/1 selection is exact in bf16; out-of-range ids give a zero row.)
    ids = ids_ref[...]                                                # (T*B, 1)
    iota_v = jax.lax.broadcasted_iota(jnp.int32, (T * B, vocab_p1), 1)
    onehot = (ids == iota_v).astype(bf16)                             # (T*B, V+1)
    x_tm = jnp.dot(onehot, emb_ref[...],
                   preferred_element_type=f32).astype(bf16)           # (T*B, D)

    # ---- layer-0 input->hidden projection hoisted over all timesteps --------
    pre0 = jnp.dot(x_tm, w_ih[0], preferred_element_type=f32) + b_l[0]  # (T*B, H)

    # ---- wavefront over (layer, timestep): layer l handles t = s - l ---------
    # T is small (8), so fully-unrolled static loops are fine.
    # TODO(synk): for T >> 16 switch to lax.fori_loop with a carried hidden
    # state (and pipeline pre0 over a T grid axis) to bound vreg live ranges.
    h = [None] * num_layers          # latest hidden state per layer (B, H) bf16
    top = []                         # top layer outputs, time order
    for s in range(T + num_layers - 1):
        prev_h = list(h)             # snapshot: all layers read pre-step state
        for l in range(num_layers):
            t = s - l
            if t < 0 or t >= T:
                continue
            if l == 0:
                acc = pre0[t * B:(t + 1) * B, :]                      # (B, H) f32
            else:
                acc = jnp.dot(prev_h[l - 1], w_ih[l],
                              preferred_element_type=f32) + b_l[l]
            if t > 0:
                acc = acc + jnp.dot(prev_h[l], w_hh[l],
                                    preferred_element_type=f32)
            h[l] = jnp.maximum(acc, 0.0).astype(bf16)
            if l == num_layers - 1:
                top.append(h[l])

    # ---- classifier: one matmul over all timesteps, one dense store ---------
    feats = jnp.concatenate(top, axis=0)                              # (T*B, H) bf16
    logits = (jnp.dot(feats, wc_ref[...], preferred_element_type=f32)
              + bc_ref[...])                                          # (T*B, 2) f32

    # Time-major -> batch_first: B*T (=16) static sublane slices + one concat;
    # off the serial chain and avoids a rank-3 transpose.
    rows = [logits[t * B + b:t * B + b + 1, :]
            for b in range(B) for t in range(T)]
    out_ref[...] = jnp.concatenate(rows, axis=0).reshape(B, T, 2)


def torch_model_forward(x_ids, params):
    """x_ids: (B, T) int token ids.  Returns logits (B, T, 2) float32."""
    emb = params["embedding"]           # (V+1, D) f32
    wih0 = params["wih0"]               # (D, H)
    wih_rest = params["wih_rest"]       # (max(L-1,1), H, H)
    whh = params["whh"]                 # (L, H, H)
    bih = params["bih"]                 # (L, 1, H)
    bhh = params["bhh"]                 # (L, 1, H)
    wc = params["wc"]                   # (H, 2)
    bc = params["bc"]                   # (1, 2)

    B, T = x_ids.shape
    L, _, H = whh.shape
    V1 = emb.shape[0]
    bf16 = jnp.bfloat16

    # Cheap host-side prep (tiny, folds under jit): time-major flat ids,
    # prefolded RNN bias, bf16 weight casts.
    ids_tm = jnp.transpose(x_ids.astype(jnp.int32)).reshape(T * B, 1)
    bias = bih + bhh                                                  # (L, 1, H)

    kernel = functools.partial(_rnn_classify_kernel, num_layers=L, seq_len=T,
                               batch=B, vocab_p1=V1)
    vmem = pltpu.MemorySpace.VMEM

    # Single program: all operands total a few KiB, VMEM-resident everywhere.
    # TODO(synk): when B grows, add a batch grid axis with
    # dimension_semantics=("parallel",) to use v7x's 2nd TensorCore, and size
    # tiles against v7x's 64 MiB physical / 32 MiB scoped VMEM (set
    # vmem_limit_bytes) rather than a v6e-sized block.
    return pl.pallas_call(
        kernel,
        out_shape=jax.ShapeDtypeStruct((B, T, 2), jnp.float32),
        in_specs=[pl.BlockSpec(memory_space=vmem)] * 8,
        out_specs=pl.BlockSpec(memory_space=vmem),
    )(ids_tm, emb.astype(bf16),
      wih0.astype(bf16), wih_rest.astype(bf16), whh.astype(bf16),
      bias, wc.astype(bf16), bc)


def reference_forward(x_ids, params):
    """Pure-JAX f32 reference matching the PyTorch module semantics."""
    x = params["embedding"][x_ids]                                    # (B, T, D)
    L = params["whh"].shape[0]
    B, T, _ = x.shape
    h_in = x
    for l in range(L):
        w_ih = params["wih0"] if l == 0 else params["wih_rest"][l - 1]
        w_hh = params["whh"][l]
        b = params["bih"][l] + params["bhh"][l]                       # (1, H)
        h = jnp.zeros((B, w_hh.shape[0]), jnp.float32)
        outs = []
        for t in range(T):
            h = jax.nn.relu(h_in[:, t, :] @ w_ih + b + h @ w_hh)
            outs.append(h)
        h_in = jnp.stack(outs, axis=1)                                # (B, T, H)
    return h_in @ params["wc"] + params["bc"]                         # (B, T, 2)


def init_params(key, vocab_size, input_dim, hidden_size, num_layers):
    """Deterministic synthetic parameters matching the nn.Module's shapes.

    PyTorch stores W_ih_l0 (H, D), W_ih_l{k>0} (H, H), W_hh (H, H), W_cls (2, H);
    we pre-transpose them for `x @ W` inside the kernel.
    """
    keys = jax.random.split(key, 8)
    D, H, L = input_dim, hidden_size, num_layers
    scale = 1.0 / jnp.sqrt(jnp.float32(H))

    embedding = jax.random.normal(keys[0], (vocab_size + 1, D), jnp.float32)
    wih0 = jax.random.uniform(keys[1], (D, H), jnp.float32, -scale, scale)
    wih_rest = jax.random.uniform(keys[2], (max(L - 1, 1), H, H), jnp.float32,
                                  -scale, scale)
    whh = jax.random.uniform(keys[3], (L, H, H), jnp.float32, -scale, scale)
    bih = jax.random.uniform(keys[4], (L, 1, H), jnp.float32, -scale, scale)
    bhh = jax.random.uniform(keys[5], (L, 1, H), jnp.float32, -scale, scale)
    wc = jax.random.uniform(keys[6], (H, 2), jnp.float32, -scale, scale)
    bc = jax.random.uniform(keys[7], (1, 2), jnp.float32, -scale, scale)
    return {
        "embedding": embedding,
        "wih0": wih0, "wih_rest": wih_rest, "whh": whh,
        "bih": bih, "bhh": bhh,
        "wc": wc, "bc": bc,
    }


if __name__ == "__main__":
    # Small shapes consistent with the module: vocab of 9 tokens (+1 pad row),
    # input_dim = hidden_size = 32, num_rnn_layer = 2, batch = 2, seq = 8.
    VOCAB_SIZE = 9
    INPUT_DIM = 32
    HIDDEN_SIZE = 32
    NUM_LAYERS = 2
    B, T = 2, 8

    key = jax.random.PRNGKey(0)
    pkey, xkey = jax.random.split(key)
    params = init_params(pkey, VOCAB_SIZE, INPUT_DIM, HIDDEN_SIZE, NUM_LAYERS)
    x_ids = jax.random.randint(xkey, (B, T), 0, VOCAB_SIZE + 1, dtype=jnp.int32)

    y_pred = jax.jit(torch_model_forward)(x_ids, params)
    y_pred = jax.block_until_ready(y_pred)

    assert y_pred.shape == (B, T, 2)
    assert y_pred.dtype == jnp.float32
    assert bool(jnp.all(jnp.isfinite(y_pred)))

    # Tolerance check vs. f32 reference (kernel runs matmuls in bf16, so a few
    # percent of drift is expected and intentional).
    y_ref = reference_forward(x_ids, params)
    scale = max(float(jnp.max(jnp.abs(y_ref))), 1.0)
    max_err = float(jnp.max(jnp.abs(y_pred - y_ref)))
    assert max_err < 0.05 * scale + 0.05, f"max_err={max_err}, scale={scale}"

    print("KERNEL_OK")
</pallas_src>

<mosaic_0001>
module attributes {stable_mosaic.version = 11 : i64} {
  func.func @_rnn_classify_kernel(%arg0: memref<16x1xi32, #tpu.memory_space<vmem>>, %arg1: memref<10x32xbf16, #tpu.memory_space<vmem>>, %arg2: memref<32x32xbf16, #tpu.memory_space<vmem>>, %arg3: memref<1x32x32xbf16, #tpu.memory_space<vmem>>, %arg4: memref<2x32x32xbf16, #tpu.memory_space<vmem>>, %arg5: memref<2x1x32xf32, #tpu.memory_space<vmem>>, %arg6: memref<32x2xbf16, #tpu.memory_space<vmem>>, %arg7: memref<1x2xf32, #tpu.memory_space<vmem>>, %arg8: memref<2x8x2xf32, #tpu.memory_space<vmem>>) attributes {dimension_semantics = [], scalar_prefetch = 0 : i64, scratch_operands = 0 : i64, tpu.core_type = #tpu.core_type<tc>} {
    %c0 = arith.constant 0 : index
    %c0_0 = arith.constant 0 : index
    %c0_1 = arith.constant 0 : index
    %0 = vector.load %arg4[%c0, %c0_0, %c0_1] : memref<2x32x32xbf16, #tpu.memory_space<vmem>>, vector<1x32x32xbf16>
    %1 = vector.shape_cast %0 : vector<1x32x32xbf16> to vector<32x32xbf16>
    %c1 = arith.constant 1 : index
    %c0_2 = arith.constant 0 : index
    %c0_3 = arith.constant 0 : index
    %2 = vector.load %arg4[%c1, %c0_2, %c0_3] : memref<2x32x32xbf16, #tpu.memory_space<vmem>>, vector<1x32x32xbf16>
    %3 = vector.shape_cast %2 : vector<1x32x32xbf16> to vector<32x32xbf16>
    %c0_4 = arith.constant 0 : index
    %c0_5 = arith.constant 0 : index
    %4 = vector.load %arg2[%c0_4, %c0_5] : memref<32x32xbf16, #tpu.memory_space<vmem>>, vector<32x32xbf16>
    %c0_6 = arith.constant 0 : index
    %c0_7 = arith.constant 0 : index
    %c0_8 = arith.constant 0 : index
    %5 = vector.load %arg3[%c0_6, %c0_7, %c0_8] : memref<1x32x32xbf16, #tpu.memory_space<vmem>>, vector<1x32x32xbf16>
    %6 = vector.shape_cast %5 : vector<1x32x32xbf16> to vector<32x32xbf16>
    %c0_9 = arith.constant 0 : index
    %c0_10 = arith.constant 0 : index
    %c0_11 = arith.constant 0 : index
    %7 = vector.load %arg5[%c0_9, %c0_10, %c0_11] : memref<2x1x32xf32, #tpu.memory_space<vmem>>, vector<1x1x32xf32>
    %8 = vector.shape_cast %7 : vector<1x1x32xf32> to vector<1x32xf32>
    %c1_12 = arith.constant 1 : index
    %c0_13 = arith.constant 0 : index
    %c0_14 = arith.constant 0 : index
    %9 = vector.load %arg5[%c1_12, %c0_13, %c0_14] : memref<2x1x32xf32, #tpu.memory_space<vmem>>, vector<1x1x32xf32>
    %10 = vector.shape_cast %9 : vector<1x1x32xf32> to vector<1x32xf32>
    %c0_15 = arith.constant 0 : index
    %c0_16 = arith.constant 0 : index
    %11 = vector.load %arg0[%c0_15, %c0_16] : memref<16x1xi32, #tpu.memory_space<vmem>>, vector<16x1xi32>
    %12 = tpu.iota {dimensions = array<i32: 1>} : vector<16x10xi32>
    %13 = vector.broadcast %11 : vector<16x1xi32> to vector<16x10xi32>
    %14 = arith.cmpi eq, %13, %12 : vector<16x10xi32>
    %15 = arith.extui %14 : vector<16x10xi1> to vector<16x10xi32>
    %16 = arith.sitofp %15 : vector<16x10xi32> to vector<16x10xf32>
    %17 = arith.truncf %16 : vector<16x10xf32> to vector<16x10xbf16>
    %c0_17 = arith.constant 0 : index
    %c0_18 = arith.constant 0 : index
    %18 = vector.load %arg1[%c0_17, %c0_18] : memref<10x32xbf16, #tpu.memory_space<vmem>>, vector<10x32xbf16>
    %cst = arith.constant dense<0.000000e+00> : vector<16x32xf32>
    %19 = tpu.matmul %17, %18, %cst {dimension_numbers = #tpu.dot_dimension_numbers<[1], [0], [0], [1], [0, 0, 1, 1], [], []>} : vector<16x10xbf16>, vector<10x32xbf16>, vector<16x32xf32> -> vector<16x32xf32>
    %20 = arith.truncf %19 : vector<16x32xf32> to vector<16x32xbf16>
    %cst_19 = arith.constant dense<0.000000e+00> : vector<16x32xf32>
    %21 = tpu.matmul %20, %4, %cst_19 {dimension_numbers = #tpu.dot_dimension_numbers<[1], [0], [0], [1], [0, 0, 1, 1], [], []>} : vector<16x32xbf16>, vector<32x32xbf16>, vector<16x32xf32> -> vector<16x32xf32>
    %22 = vector.broadcast %8 : vector<1x32xf32> to vector<16x32xf32>
    %23 = arith.addf %21, %22 : vector<16x32xf32>
    %24 = vector.extract_strided_slice %23 {offsets = [0, 0], sizes = [2, 32], strides = [1, 1]} : vector<16x32xf32> to vector<2x32xf32>
    %cst_20 = arith.constant 0.000000e+00 : f32
    %25 = vector.broadcast %cst_20 : f32 to vector<2x32xf32>
    %26 = arith.maximumf %24, %25 : vector<2x32xf32>
    %27 = arith.truncf %26 : vector<2x32xf32> to vector<2x32xbf16>
    %28 = vector.extract_strided_slice %23 {offsets = [2, 0], sizes = [2, 32], strides = [1, 1]} : vector<16x32xf32> to vector<2x32xf32>
    %cst_21 = arith.constant dense<0.000000e+00> : vector<2x32xf32>
    %29 = tpu.matmul %27, %1, %cst_21 {dimension_numbers = #tpu.dot_dimension_numbers<[1], [0], [0], [1], [0, 0, 1, 1], [], []>} : vector<2x32xbf16>, vector<32x32xbf16>, vector<2x32xf32> -> vector<2x32xf32>
    %30 = arith.addf %28, %29 : vector<2x32xf32>
    %cst_22 = arith.constant 0.000000e+00 : f32
    %31 = vector.broadcast %cst_22 : f32 to vector<2x32xf32>
    %32 = arith.maximumf %30, %31 : vector<2x32xf32>
    %33 = arith.truncf %32 : vector<2x32xf32> to vector<2x32xbf16>
    %cst_23 = arith.constant dense<0.000000e+00> : vector<2x32xf32>
    %34 = tpu.matmul %27, %6, %cst_23 {dimension_numbers = #tpu.dot_dimension_numbers<[1], [0], [0], [1], [0, 0, 1, 1], [], []>} : vector<2x32xbf16>, vector<32x32xbf16>, vector<2x32xf32> -> vector<2x32xf32>
    %35 = vector.broadcast %10 : vector<1x32xf32> to vector<2x32xf32>
    %36 = arith.addf %34, %35 : vector<2x32xf32>
    %cst_24 = arith.constant 0.000000e+00 : f32
    %37 = vector.broadcast %cst_24 : f32 to vector<2x32xf32>
    %38 = arith.maximumf %36, %37 : vector<2x32xf32>
    %39 = arith.truncf %38 : vector<2x32xf32> to vector<2x32xbf16>
    %40 = vector.extract_strided_slice %23 {offsets = [4, 0], sizes = [2, 32], strides = [1, 1]} : vector<16x32xf32> to vector<2x32xf32>
    %cst_25 = arith.constant dense<0.000000e+00> : vector<2x32xf32>
    %41 = tpu.matmul %33, %1, %cst_25 {dimension_numbers = #tpu.dot_dimension_numbers<[1], [0], [0], [1], [0, 0, 1, 1], [], []>} : vector<2x32xbf16>, vector<32x32xbf16>, vector<2x32xf32> -> vector<2x32xf32>
    %42 = arith.addf %40, %41 : vector<2x32xf32>
    %cst_26 = arith.constant 0.000000e+00 : f32
    %43 = vector.broadcast %cst_26 : f32 to vector<2x32xf32>
    %44 = arith.maximumf %42, %43 : vector<2x32xf32>
    %45 = arith.truncf %44 : vector<2x32xf32> to vector<2x32xbf16>
    %cst_27 = arith.constant dense<0.000000e+00> : vector<2x32xf32>
    %46 = tpu.matmul %33, %6, %cst_27 {dimension_numbers = #tpu.dot_dimension_numbers<[1], [0], [0], [1], [0, 0, 1, 1], [], []>} : vector<2x32xbf16>, vector<32x32xbf16>, vector<2x32xf32> -> vector<2x32xf32>
    %47 = vector.broadcast %10 : vector<1x32xf32> to vector<2x32xf32>
    %48 = arith.addf %46, %47 : vector<2x32xf32>
    %cst_28 = arith.constant dense<0.000000e+00> : vector<2x32xf32>
    %49 = tpu.matmul %39, %3, %cst_28 {dimension_numbers = #tpu.dot_dimension_numbers<[1], [0], [0], [1], [0, 0, 1, 1], [], []>} : vector<2x32xbf16>, vector<32x32xbf16>, vector<2x32xf32> -> vector<2x32xf32>
    %50 = arith.addf %48, %49 : vector<2x32xf32>
    %cst_29 = arith.constant 0.000000e+00 : f32
    %51 = vector.broadcast %cst_29 : f32 to vector<2x32xf32>
    %52 = arith.maximumf %50, %51 : vector<2x32xf32>
    %53 = arith.truncf %52 : vector<2x32xf32> to vector<2x32xbf16>
    %54 = vector.extract_strided_slice %23 {offsets = [6, 0], sizes = [2, 32], strides = [1, 1]} : vector<16x32xf32> to vector<2x32xf32>
    %cst_30 = arith.constant dense<0.000000e+00> : vector<2x32xf32>
    %55 = tpu.matmul %45, %1, %cst_30 {dimension_numbers = #tpu.dot_dimension_numbers<[1], [0], [0], [1], [0, 0, 1, 1], [], []>} : vector<2x32xbf16>, vector<32x32xbf16>, vector<2x32xf32> -> vector<2x32xf32>
    %56 = arith.addf %54, %55 : vector<2x32xf32>
    %cst_31 = arith.constant 0.000000e+00 : f32
    %57 = vector.broadcast %cst_31 : f32 to vector<2x32xf32>
    %58 = arith.maximumf %56, %57 : vector<2x32xf32>
    %59 = arith.truncf %58 : vector<2x32xf32> to vector<2x32xbf16>
    %cst_32 = arith.constant dense<0.000000e+00> : vector<2x32xf32>
    %60 = tpu.matmul %45, %6, %cst_32 {dimension_numbers = #tpu.dot_dimension_numbers<[1], [0], [0], [1], [0, 0, 1, 1], [], []>} : vector<2x32xbf16>, vector<32x32xbf16>, vector<2x32xf32> -> vector<2x32xf32>
    %61 = vector.broadcast %10 : vector<1x32xf32> to vector<2x32xf32>
    %62 = arith.addf %60, %61 : vector<2x32xf32>
    %cst_33 = arith.constant dense<0.000000e+00> : vector<2x32xf32>
    %63 = tpu.matmul %53, %3, %cst_33 {dimension_numbers = #tpu.dot_dimension_numbers<[1], [0], [0], [1], [0, 0, 1, 1], [], []>} : vector<2x32xbf16>, vector<32x32xbf16>, vector<2x32xf32> -> vector<2x32xf32>
    %64 = arith.addf %62, %63 : vector<2x32xf32>
    %cst_34 = arith.constant 0.000000e+00 : f32
    %65 = vector.broadcast %cst_34 : f32 to vector<2x32xf32>
    %66 = arith.maximumf %64, %65 : vector<2x32xf32>
    %67 = arith.truncf %66 : vector<2x32xf32> to vector<2x32xbf16>
    %68 = vector.extract_strided_slice %23 {offsets = [8, 0], sizes = [2, 32], strides = [1, 1]} : vector<16x32xf32> to vector<2x32xf32>
    %cst_35 = arith.constant dense<0.000000e+00> : vector<2x32xf32>
    %69 = tpu.matmul %59, %1, %cst_35 {dimension_numbers = #tpu.dot_dimension_numbers<[1], [0], [0], [1], [0, 0, 1, 1], [], []>} : vector<2x32xbf16>, vector<32x32xbf16>, vector<2x32xf32> -> vector<2x32xf32>
    %70 = arith.addf %68, %69 : vector<2x32xf32>
    %cst_36 = arith.constant 0.000000e+00 : f32
    %71 = vector.broadcast %cst_36 : f32 to vector<2x32xf32>
    %72 = arith.maximumf %70, %71 : vector<2x32xf32>
    %73 = arith.truncf %72 : vector<2x32xf32> to vector<2x32xbf16>
    %cst_37 = arith.constant dense<0.000000e+00> : vector<2x32xf32>
    %74 = tpu.matmul %59, %6, %cst_37 {dimension_numbers = #tpu.dot_dimension_numbers<[1], [0], [0], [1], [0, 0, 1, 1], [], []>} : vector<2x32xbf16>, vector<32x32xbf16>, vector<2x32xf32> -> vector<2x32xf32>
    %75 = vector.broadcast %10 : vector<1x32xf32> to vector<2x32xf32>
    %76 = arith.addf %74, %75 : vector<2x32xf32>
    %cst_38 = arith.constant dense<0.000000e+00> : vector<2x32xf32>
    %77 = tpu.matmul %67, %3, %cst_38 {dimension_numbers = #tpu.dot_dimension_numbers<[1], [0], [0], [1], [0, 0, 1, 1], [], []>} : vector<2x32xbf16>, vector<32x32xbf16>, vector<2x32xf32> -> vector<2x32xf32>
    %78 = arith.addf %76, %77 : vector<2x32xf32>
    %cst_39 = arith.constant 0.000000e+00 : f32
    %79 = vector.broadcast %cst_39 : f32 to vector<2x32xf32>
    %80 = arith.maximumf %78, %79 : vector<2x32xf32>
    %81 = arith.truncf %80 : vector<2x32xf32> to vector<2x32xbf16>
    %82 = vector.extract_strided_slice %23 {offsets = [10, 0], sizes = [2, 32], strides = [1, 1]} : vector<16x32xf32> to vector<2x32xf32>
    %cst_40 = arith.constant dense<0.000000e+00> : vector<2x32xf32>
    %83 = tpu.matmul %73, %1, %cst_40 {dimension_numbers = #tpu.dot_dimension_numbers<[1], [0], [0], [1], [0, 0, 1, 1], [], []>} : vector<2x32xbf16>, vector<32x32xbf16>, vector<2x32xf32> -> vector<2x32xf32>
    %84 = arith.addf %82, %83 : vector<2x32xf32>
    %cst_41 = arith.constant 0.000000e+00 : f32
    %85 = vector.broadcast %cst_41 : f32 to vector<2x32xf32>
    %86 = arith.maximumf %84, %85 : vector<2x32xf32>
    %87 = arith.truncf %86 : vector<2x32xf32> to vector<2x32xbf16>
    %cst_42 = arith.constant dense<0.000000e+00> : vector<2x32xf32>
    %88 = tpu.matmul %73, %6, %cst_42 {dimension_numbers = #tpu.dot_dimension_numbers<[1], [0], [0], [1], [0, 0, 1, 1], [], []>} : vector<2x32xbf16>, vector<32x32xbf16>, vector<2x32xf32> -> vector<2x32xf32>
    %89 = vector.broadcast %10 : vector<1x32xf32> to vector<2x32xf32>
    %90 = arith.addf %88, %89 : vector<2x32xf32>
    %cst_43 = arith.constant dense<0.000000e+00> : vector<2x32xf32>
    %91 = tpu.matmul %81, %3, %cst_43 {dimension_numbers = #tpu.dot_dimension_numbers<[1], [0], [0], [1], [0, 0, 1, 1], [], []>} : vector<2x32xbf16>, vector<32x32xbf16>, vector<2x32xf32> -> vector<2x32xf32>
    %92 = arith.addf %90, %91 : vector<2x32xf32>
    %cst_44 = arith.constant 0.000000e+00 : f32
    %93 = vector.broadcast %cst_44 : f32 to vector<2x32xf32>
    %94 = arith.maximumf %92, %93 : vector<2x32xf32>
    %95 = arith.truncf %94 : vector<2x32xf32> to vector<2x32xbf16>
    %96 = vector.extract_strided_slice %23 {offsets = [12, 0], sizes = [2, 32], strides = [1, 1]} : vector<16x32xf32> to vector<2x32xf32>
    %cst_45 = arith.constant dense<0.000000e+00> : vector<2x32xf32>
    %97 = tpu.matmul %87, %1, %cst_45 {dimension_numbers = #tpu.dot_dimension_numbers<[1], [0], [0], [1], [0, 0, 1, 1], [], []>} : vector<2x32xbf16>, vector<32x32xbf16>, vector<2x32xf32> -> vector<2x32xf32>
    %98 = arith.addf %96, %97 : vector<2x32xf32>
    %cst_46 = arith.constant 0.000000e+00 : f32
    %99 = vector.broadcast %cst_46 : f32 to vector<2x32xf32>
    %100 = arith.maximumf %98, %99 : vector<2x32xf32>
    %101 = arith.truncf %100 : vector<2x32xf32> to vector<2x32xbf16>
    %cst_47 = arith.constant dense<0.000000e+00> : vector<2x32xf32>
    %102 = tpu.matmul %87, %6, %cst_47 {dimension_numbers = #tpu.dot_dimension_numbers<[1], [0], [0], [1], [0, 0, 1, 1], [], []>} : vector<2x32xbf16>, vector<32x32xbf16>, vector<2x32xf32> -> vector<2x32xf32>
    %103 = vector.broadcast %10 : vector<1x32xf32> to vector<2x32xf32>
    %104 = arith.addf %102, %103 : vector<2x32xf32>
    %cst_48 = arith.constant dense<0.000000e+00> : vector<2x32xf32>
    %105 = tpu.matmul %95, %3, %cst_48 {dimension_numbers = #tpu.dot_dimension_numbers<[1], [0], [0], [1], [0, 0, 1, 1], [], []>} : vector<2x32xbf16>, vector<32x32xbf16>, vector<2x32xf32> -> vector<2x32xf32>
    %106 = arith.addf %104, %105 : vector<2x32xf32>
    %cst_49 = arith.constant 0.000000e+00 : f32
    %107 = vector.broadcast %cst_49 : f32 to vector<2x32xf32>
    %108 = arith.maximumf %106, %107 : vector<2x32xf32>
    %109 = arith.truncf %108 : vector<2x32xf32> to vector<2x32xbf16>
    %110 = vector.extract_strided_slice %23 {offsets = [14, 0], sizes = [2, 32], strides = [1, 1]} : vector<16x32xf32> to vector<2x32xf32>
    %cst_50 = arith.constant dense<0.000000e+00> : vector<2x32xf32>
    %111 = tpu.matmul %101, %1, %cst_50 {dimension_numbers = #tpu.dot_dimension_numbers<[1], [0], [0], [1], [0, 0, 1, 1], [], []>} : vector<2x32xbf16>, vector<32x32xbf16>, vector<2x32xf32> -> vector<2x32xf32>
    %112 = arith.addf %110, %111 : vector<2x32xf32>
    %cst_51 = arith.constant 0.000000e+00 : f32
    %113 = vector.broadcast %cst_51 : f32 to vector<2x32xf32>
    %114 = arith.maximumf %112, %113 : vector<2x32xf32>
    %115 = arith.truncf %114 : vector<2x32xf32> to vector<2x32xbf16>
    %cst_52 = arith.constant dense<0.000000e+00> : vector<2x32xf32>
    %116 = tpu.matmul %101, %6, %cst_52 {dimension_numbers = #tpu.dot_dimension_numbers<[1], [0], [0], [1], [0, 0, 1, 1], [], []>} : vector<2x32xbf16>, vector<32x32xbf16>, vector<2x32xf32> -> vector<2x32xf32>
    %117 = vector.broadcast %10 : vector<1x32xf32> to vector<2x32xf32>
    %118 = arith.addf %116, %117 : vector<2x32xf32>
    %cst_53 = arith.constant dense<0.000000e+00> : vector<2x32xf32>
    %119 = tpu.matmul %109, %3, %cst_53 {dimension_numbers = #tpu.dot_dimension_numbers<[1], [0], [0], [1], [0, 0, 1, 1], [], []>} : vector<2x32xbf16>, vector<32x32xbf16>, vector<2x32xf32> -> vector<2x32xf32>
    %120 = arith.addf %118, %119 : vector<2x32xf32>
    %cst_54 = arith.constant 0.000000e+00 : f32
    %121 = vector.broadcast %cst_54 : f32 to vector<2x32xf32>
    %122 = arith.maximumf %120, %121 : vector<2x32xf32>
    %123 = arith.truncf %122 : vector<2x32xf32> to vector<2x32xbf16>
    %cst_55 = arith.constant dense<0.000000e+00> : vector<2x32xf32>
    %124 = tpu.matmul %115, %6, %cst_55 {dimension_numbers = #tpu.dot_dimension_numbers<[1], [0], [0], [1], [0, 0, 1, 1], [], []>} : vector<2x32xbf16>, vector<32x32xbf16>, vector<2x32xf32> -> vector<2x32xf32>
    %125 = vector.broadcast %10 : vector<1x32xf32> to vector<2x32xf32>
    %126 = arith.addf %124, %125 : vector<2x32xf32>
    %cst_56 = arith.constant dense<0.000000e+00> : vector<2x32xf32>
    %127 = tpu.matmul %123, %3, %cst_56 {dimension_numbers = #tpu.dot_dimension_numbers<[1], [0], [0], [1], [0, 0, 1, 1], [], []>} : vector<2x32xbf16>, vector<32x32xbf16>, vector<2x32xf32> -> vector<2x32xf32>
    %128 = arith.addf %126, %127 : vector<2x32xf32>
    %cst_57 = arith.constant 0.000000e+00 : f32
    %129 = vector.broadcast %cst_57 : f32 to vector<2x32xf32>
    %130 = arith.maximumf %128, %129 : vector<2x32xf32>
    %131 = arith.truncf %130 : vector<2x32xf32> to vector<2x32xbf16>
    %132 = tpu.concatenate %39, %53, %67, %81, %95, %109, %123, %131 in 0 : vector<2x32xbf16>, vector<2x32xbf16>, vector<2x32xbf16>, vector<2x32xbf16>, vector<2x32xbf16>, vector<2x32xbf16>, vector<2x32xbf16>, vector<2x32xbf16> -> vector<16x32xbf16>
    %c0_58 = arith.constant 0 : index
    %c0_59 = arith.constant 0 : index
    %133 = vector.load %arg6[%c0_58, %c0_59] : memref<32x2xbf16, #tpu.memory_space<vmem>>, vector<32x2xbf16>
    %cst_60 = arith.constant dense<0.000000e+00> : vector<16x2xf32>
    %134 = tpu.matmul %132, %133, %cst_60 {dimension_numbers = #tpu.dot_dimension_numbers<[1], [0], [0], [1], [0, 0, 1, 1], [], []>} : vector<16x32xbf16>, vector<32x2xbf16>, vector<16x2xf32> -> vector<16x2xf32>
    %c0_61 = arith.constant 0 : index
    %c0_62 = arith.constant 0 : index
    %135 = vector.load %arg7[%c0_61, %c0_62] : memref<1x2xf32, #tpu.memory_space<vmem>>, vector<1x2xf32>
    %136 = vector.broadcast %135 : vector<1x2xf32> to vector<16x2xf32>
    %137 = arith.addf %134, %136 : vector<16x2xf32>
    %138 = vector.extract_strided_slice %137 {offsets = [0, 0], sizes = [1, 2], strides = [1, 1]} : vector<16x2xf32> to vector<1x2xf32>
    %139 = vector.extract_strided_slice %137 {offsets = [2, 0], sizes = [1, 2], strides = [1, 1]} : vector<16x2xf32> to vector<1x2xf32>
    %140 = vector.extract_strided_slice %137 {offsets = [4, 0], sizes = [1, 2], strides = [1, 1]} : vector<16x2xf32> to vector<1x2xf32>
    %141 = vector.extract_strided_slice %137 {offsets = [6, 0], sizes = [1, 2], strides = [1, 1]} : vector<16x2xf32> to vector<1x2xf32>
    %142 = vector.extract_strided_slice %137 {offsets = [8, 0], sizes = [1, 2], strides = [1, 1]} : vector<16x2xf32> to vector<1x2xf32>
    %143 = vector.extract_strided_slice %137 {offsets = [10, 0], sizes = [1, 2], strides = [1, 1]} : vector<16x2xf32> to vector<1x2xf32>
    %144 = vector.extract_strided_slice %137 {offsets = [12, 0], sizes = [1, 2], strides = [1, 1]} : vector<16x2xf32> to vector<1x2xf32>
    %145 = vector.extract_strided_slice %137 {offsets = [14, 0], sizes = [1, 2], strides = [1, 1]} : vector<16x2xf32> to vector<1x2xf32>
    %146 = vector.extract_strided_slice %137 {offsets = [1, 0], sizes = [1, 2], strides = [1, 1]} : vector<16x2xf32> to vector<1x2xf32>
    %147 = vector.extract_strided_slice %137 {offsets = [3, 0], sizes = [1, 2], strides = [1, 1]} : vector<16x2xf32> to vector<1x2xf32>
    %148 = vector.extract_strided_slice %137 {offsets = [5, 0], sizes = [1, 2], strides = [1, 1]} : vector<16x2xf32> to vector<1x2xf32>
    %149 = vector.extract_strided_slice %137 {offsets = [7, 0], sizes = [1, 2], strides = [1, 1]} : vector<16x2xf32> to vector<1x2xf32>
    %150 = vector.extract_strided_slice %137 {offsets = [9, 0], sizes = [1, 2], strides = [1, 1]} : vector<16x2xf32> to vector<1x2xf32>
    %151 = vector.extract_strided_slice %137 {offsets = [11, 0], sizes = [1, 2], strides = [1, 1]} : vector<16x2xf32> to vector<1x2xf32>
    %152 = vector.extract_strided_slice %137 {offsets = [13, 0], sizes = [1, 2], strides = [1, 1]} : vector<16x2xf32> to vector<1x2xf32>
    %153 = vector.extract_strided_slice %137 {offsets = [15, 0], sizes = [1, 2], strides = [1, 1]} : vector<16x2xf32> to vector<1x2xf32>
    %154 = tpu.concatenate %138, %139, %140, %141, %142, %143, %144, %145, %146, %147, %148, %149, %150, %151, %152, %153 in 0 : vector<1x2xf32>, vector<1x2xf32>, vector<1x2xf32>, vector<1x2xf32>, vector<1x2xf32>, vector<1x2xf32>, vector<1x2xf32>, vector<1x2xf32>, vector<1x2xf32>, vector<1x2xf32>, vector<1x2xf32>, vector<1x2xf32>, vector<1x2xf32>, vector<1x2xf32>, vector<1x2xf32>, vector<1x2xf32> -> vector<16x2xf32>
    %155 = vector.shape_cast %154 : vector<16x2xf32> to vector<2x8x2xf32>
    %c0_63 = arith.constant 0 : index
    %c0_64 = arith.constant 0 : index
    %c0_65 = arith.constant 0 : index
    %156 = vector.load %arg8[%c0_63, %c0_64, %c0_65] : memref<2x8x2xf32, #tpu.memory_space<vmem>>, vector<2x8x2xf32>
    tpu.vector_store %arg8[%c0_63, %c0_64, %c0_65], %155 {strides = array<i32>} : memref<2x8x2xf32, #tpu.memory_space<vmem>>, vector<2x8x2xf32>,
    return
  }
}

</mosaic_0001>

<llo_original>
// kernel: torch_model_forward.1
$region0: #{torch_model_forward.1}
  #allocation0 [shape = 'u32[]', space=smem, size = 0x4, offset = 0x4, fixed_abs, tag = 'smem constant byte address 0x4 - core index']
  #allocation1 [shape = 'u32[144,128]{1,0:T(1,128)}', space=vmem, size = 0x12000, scoped, tag = 'internal scratch']
  %s0 = inlined_call_operand.vmem [shape: s32[16,1], index: 0, kind: input, shape index: {}]
  %s1 = inlined_call_operand.vmem [shape: bf16[10,32], index: 1, kind: input, shape index: {}]
  %s2 = inlined_call_operand.vmem [shape: bf16[32,32], index: 2, kind: input, shape index: {}]
  %s3 = inlined_call_operand.vmem [shape: bf16[1,32,32], index: 3, kind: input, shape index: {}]
  %s4 = inlined_call_operand.vmem [shape: bf16[2,32,32], index: 4, kind: input, shape index: {}]
  %s5 = inlined_call_operand.vmem [shape: f32[2,1,32], index: 5, kind: input, shape index: {}]
  %s6 = inlined_call_operand.vmem [shape: bf16[32,2], index: 6, kind: input, shape index: {}]
  %s7 = inlined_call_operand.vmem [shape: f32[1,2], index: 7, kind: input, shape index: {}]
  %s8 = inlined_call_operand.vmem [shape: f32[2,8,2], index: 8, kind: output, shape index: {}]
  %s9 = sld [smem:[#allocation0]]
  $region42: #{torch_model_forward.1} parent=0
    _
  %s11 = ssub.s32 1, %s9
  %s12 = scalar_select 0, %s11, %s9
  // Predicated region
  $region2: #{torch_model_forward.1} parent=0 // pred_check
    _
  $region3: #{torch_model_forward.1} parent=0 // pred_check_branch
    %14 = sbr.rel (0) target = $region5
  $region4: #{torch_model_forward.1} parent=0 // pred_region
    _
  $region5: #{torch_model_forward.1} parent=0 // pred_fallthru
    _
  // Predicated region
  $region6: #{torch_model_forward.1} parent=0 // pred_check
    _
  $region7: #{torch_model_forward.1} parent=0 // pred_check_branch
    %16 = sbr.rel (0) target = $region9
  $region8: #{torch_model_forward.1} parent=0 // pred_region
    _
  $region9: #{torch_model_forward.1} parent=0 // pred_fallthru
    _
  // Predicated region
  $region10: #{torch_model_forward.1} parent=0 // pred_check
    _
  $region11: #{torch_model_forward.1} parent=0 // pred_check_branch
    %18 = sbr.rel (0) target = $region13
  $region12: #{torch_model_forward.1} parent=0 // pred_region
    _
  $region13: #{torch_model_forward.1} parent=0 // pred_fallthru
    _
  // Predicated region
  $region14: #{torch_model_forward.1} parent=0 // pred_check
    _
  $region15: #{torch_model_forward.1} parent=0 // pred_check_branch
    %20 = sbr.rel (0) target = $region17
  $region16: #{torch_model_forward.1} parent=0 // pred_region
    _
  $region17: #{torch_model_forward.1} parent=0 // pred_fallthru
    _
  // Predicated region
  $region18: #{torch_model_forward.1} parent=0 // pred_check
    _
  $region19: #{torch_model_forward.1} parent=0 // pred_check_branch
    %22 = sbr.rel (0) target = $region21
  $region20: #{torch_model_forward.1} parent=0 // pred_region
    _
  $region21: #{torch_model_forward.1} parent=0 // pred_fallthru
    _
  // Predicated region
  $region22: #{torch_model_forward.1} parent=0 // pred_check
    _
  $region23: #{torch_model_forward.1} parent=0 // pred_check_branch
    %24 = sbr.rel (0) target = $region25
  $region24: #{torch_model_forward.1} parent=0 // pred_region
    _
  $region25: #{torch_model_forward.1} parent=0 // pred_fallthru
    _
  // Predicated region
  $region26: #{torch_model_forward.1} parent=0 // pred_check
    _
  $region27: #{torch_model_forward.1} parent=0 // pred_check_branch
    %26 = sbr.rel (0) target = $region29
  $region28: #{torch_model_forward.1} parent=0 // pred_region
    _
  $region29: #{torch_model_forward.1} parent=0 // pred_fallthru
    _
  // Predicated region
  $region30: #{torch_model_forward.1} parent=0 // pred_check
    _
  $region31: #{torch_model_forward.1} parent=0 // pred_check_branch
    %28 = sbr.rel (0) target = $region33
  $region32: #{torch_model_forward.1} parent=0 // pred_region
    _
  $region33: #{torch_model_forward.1} parent=0 // pred_fallthru
    _
  %v30 = vld [vmem:[%s4] sm:$0xf]
  %v31 = vld [vmem:[%s4 + $0x4] sm:$0xf]
  %v32 = vld [vmem:[%s4 + $0x8] sm:$0xf]
  %v33 = vld [vmem:[%s4 + $0xc] sm:$0xf]
  %s34 = scalar_lea.vmem %s4, 16
  %v35 = vld [vmem:[%s34] sm:$0xf]
  %v36 = vld [vmem:[%s34 + $0x4] sm:$0xf]
  %v37 = vld [vmem:[%s34 + $0x8] sm:$0xf]
  %v38 = vld [vmem:[%s34 + $0xc] sm:$0xf]
  %v39 = vld [vmem:[%s2] sm:$0xf]
  %v40 = vld [vmem:[%s2 + $0x4] sm:$0xf]
  %v41 = vld [vmem:[%s2 + $0x8] sm:$0xf]
  %v42 = vld [vmem:[%s2 + $0xc] sm:$0xf]
  %v43 = vld [vmem:[%s3] sm:$0xf]
  %v44 = vld [vmem:[%s3 + $0x4] sm:$0xf]
  %v45 = vld [vmem:[%s3 + $0x8] sm:$0xf]
  %v46 = vld [vmem:[%s3 + $0xc] sm:$0xf]
  %v47 = vld [vmem:[%s5] sm:$0x1]
  %s48 = scalar_lea.vmem %s5, 1
  %v49 = vld [vmem:[%s48] sm:$0x1]
  %v50 = vld [vmem:[%s0] sm:$0xff]
  %v51 = vld [vmem:[%s0 + $0x8] sm:$0xff]
  %v52 = vlaneseq
  %v53 = vand.u32 %v52, 127
  %54 = vset.pattern.permute.xlu0 0
  %55 = vperm.xlu0 %54, %v50
  %v56 = vpop.permute.xlu0 %55
  %57 = vset.pattern.permute.xlu0 0
  %58 = vperm.xlu0 %57, %v51
  %v59 = vpop.permute.xlu0 %58
  %vm60 = vcmp.eq.s32.totalorder %v56, %v53
  %vm61 = vcmp.eq.s32.totalorder %v59, %v53
  %v62 = vsel %vm60, 1, 0
  %v63 = vsel %vm61, 1, 0
  %v64 = vcvt.s32.f32 %v62
  %v65 = vcvt.s32.f32 %v63
  %v66 = vpack.c.bf16 %v65, %v64
  %v67 = vld [vmem:[%s1] sm:$0xf]
  %v68 = vld [vmem:[%s1 + $0x4] sm:$0x1]
  %v71 = vunpack.c.l.b16 %v67
  %v72 = vunpack.c.l.b16 %v68
  %v73 = vpack.c.b16 %v72, %v71
  %vm74 = vcmask 80896
  %v76 = vsel %vm74, %v66, 0
  %vm78 = vcmask 1044480
  %v80 = vsel %vm78, %v73, 0
  %82 = vmatprep.subr.bf16.mxu0 0
  %83 = vmatpush1.bf16.msra.mxu0 0
  %84 = vmatprep.subr.bf16.mxu0 0
  %85 = vmatpush1.bf16.msra.mxu0 0
  %86 = vmatprep.subr.bf16.mxu0 0
  %87 = vmatpush1.bf16.msra.mxu0 0
  %88 = vmatprep.subr.bf16.mxu0 0
  %89 = vmatpush1.bf16.msra.mxu0 0
  %90 = vmatprep.subr.bf16.mxu0 0
  %91 = vmatpush1.bf16.msra.mxu0 0
  %92 = vmatprep.subr.bf16.mxu0 0
  %93 = vmatpush1.bf16.msra.mxu0 0
  %94 = vmatprep.subr.bf16.mxu0 0
  %95 = vmatpush1.bf16.msra.mxu0 0
  %96 = vmatprep.subr.bf16.mxu0 0
  %97 = vmatpush1.bf16.msra.mxu0 %v80
  %98 = vmatprep.subr.bf16.mxu0 0
  %99 = vmatpush2.bf16.msra.mxu0 0
  %100 = vmatprep.subr.bf16.mxu0 0
  %101 = vmatpush2.bf16.msra.mxu0 0
  %102 = vmatprep.subr.bf16.mxu0 0
  %103 = vmatpush2.bf16.msra.mxu0 0
  %104 = vmatprep.subr.bf16.mxu0 0
  %105 = vmatpush2.bf16.msra.mxu0 0
  %106 = vmatprep.subr.bf16.mxu0 0
  %107 = vmatpush2.bf16.msra.mxu0 0
  %108 = vmatprep.subr.bf16.mxu0 0
  %109 = vmatpush2.bf16.msra.mxu0 0
  %110 = vmatprep.subr.bf16.mxu0 0
  %111 = vmatpush2.bf16.msra.mxu0 0
  %112 = vmatprep.subr.bf16.mxu0 0
  %113 = vmatpush2.bf16.msra.mxu0 0
  %114 = vmatprep.mubr.bf16.mxu0 0
  %115 = vmatmul.mubr.bf16.gmra.mxu0 %v76
  %v116 = vpop.f32.mrf.mxu0
  %v117 = vadd.f32 0.0, %v116
  %v118 = vpop.f32.mrf.mxu0
  %v119 = vpop.f32.mrf.mxu0
  %v120 = vadd.f32 0.0, %v119
  %v121 = vpop.f32.mrf.mxu0
  %122 = vdwg.mxu0
  %v123 = vpack.c.bf16 %v120, %v117
  %v125 = vlaneseq
  %v126 = vshrl.u32 %v125, 7
  %v127 = vsub.s32 0, %v126
  %v128 = vrot.slane %v47, %v127
  %v134 = vunpack.c.l.b16 %v39
  %v135 = vunpack.c.l.b16 %v40
  %v136 = vunpack.c.l.b16 %v41
  %v137 = vunpack.c.l.b16 %v42
  %v138 = vpack.c.b16 %v135, %v134
  %v139 = vpack.c.b16 %v137, %v136
  %vm142 = vcmask 261120
  %v144 = vsel %vm142, %v123, 0
  %146 = vmatprep.subr.bf16.mxu0 0
  %147 = vmatpush1.bf16.msra.mxu0 0
  %148 = vmatprep.subr.bf16.mxu0 0
  %149 = vmatpush1.bf16.msra.mxu0 0
  %150 = vmatprep.subr.bf16.mxu0 0
  %151 = vmatpush1.bf16.msra.mxu0 0
  %152 = vmatprep.subr.bf16.mxu0 0
  %153 = vmatpush1.bf16.msra.mxu0 0
  %154 = vmatprep.subr.bf16.mxu0 0
  %155 = vmatpush1.bf16.msra.mxu0 0
  %156 = vmatprep.subr.bf16.mxu0 0
  %157 = vmatpush1.bf16.msra.mxu0 0
  %158 = vmatprep.subr.bf16.mxu0 0
  %159 = vmatpush1.bf16.msra.mxu0 %v139
  %160 = vmatprep.subr.bf16.mxu0 0
  %161 = vmatpush1.bf16.msra.mxu0 %v138
  %162 = vmatprep.subr.bf16.mxu0 0
  %163 = vmatpush2.bf16.msra.mxu0 0
  %164 = vmatprep.subr.bf16.mxu0 0
  %165 = vmatpush2.bf16.msra.mxu0 0
  %166 = vmatprep.subr.bf16.mxu0 0
  %167 = vmatpush2.bf16.msra.mxu0 0
  %168 = vmatprep.subr.bf16.mxu0 0
  %169 = vmatpush2.bf16.msra.mxu0 0
  %170 = vmatprep.subr.bf16.mxu0 0
  %171 = vmatpush2.bf16.msra.mxu0 0
  %172 = vmatprep.subr.bf16.mxu0 0
  %173 = vmatpush2.bf16.msra.mxu0 0
  %174 = vmatprep.subr.bf16.mxu0 0
  %175 = vmatpush2.bf16.msra.mxu0 0
  %176 = vmatprep.subr.bf16.mxu0 0
  %177 = vmatpush2.bf16.msra.mxu0 0
  %178 = vmatprep.mubr.bf16.mxu0 0
  %179 = vmatmul.mubr.bf16.gmra.mxu0 %v144
  %v180 = vpop.f32.mrf.mxu0
  %v181 = vadd.f32 %v128, %v180
  %v182 = vpop.f32.mrf.mxu0
  %v183 = vpop.f32.mrf.mxu0
  %v184 = vadd.f32 %v128, %v183
  %v185 = vpop.f32.mrf.mxu0
  %186 = vdwg.mxu0
  %v187 = vmax.f32 %v181, 0.0
  %v188 = vpack.c.bf16 %v187, %v187
  %v193 = vunpack.c.l.b16 %v30
  %v194 = vunpack.c.l.b16 %v31
  %v195 = vunpack.c.l.b16 %v32
  %v196 = vunpack.c.l.b16 %v33
  %v197 = vpack.c.b16 %v194, %v193
  %v198 = vpack.c.b16 %v196, %v195
  %v202 = vsel %vm142, %v188, 0
  %204 = vmatprep.subr.bf16.mxu0 0
  %205 = vmatpush1.bf16.msra.mxu0 0
  %206 = vmatprep.subr.bf16.mxu0 0
  %207 = vmatpush1.bf16.msra.mxu0 0
  %208 = vmatprep.subr.bf16.mxu0 0
  %209 = vmatpush1.bf16.msra.mxu0 0
  %210 = vmatprep.subr.bf16.mxu0 0
  %211 = vmatpush1.bf16.msra.mxu0 0
  %212 = vmatprep.subr.bf16.mxu0 0
  %213 = vmatpush1.bf16.msra.mxu0 0
  %214 = vmatprep.subr.bf16.mxu0 0
  %215 = vmatpush1.bf16.msra.mxu0 0
  %216 = vmatprep.subr.bf16.mxu0 0
  %217 = vmatpush1.bf16.msra.mxu0 %v198
  %218 = vmatprep.subr.bf16.mxu0 0
  %219 = vmatpush1.bf16.msra.mxu0 %v197
  %220 = vmatprep.subr.bf16.mxu0 0
  %221 = vmatpush2.bf16.msra.mxu0 0
  %222 = vmatprep.subr.bf16.mxu0 0
  %223 = vmatpush2.bf16.msra.mxu0 0
  %224 = vmatprep.subr.bf16.mxu0 0
  %225 = vmatpush2.bf16.msra.mxu0 0
  %226 = vmatprep.subr.bf16.mxu0 0
  %227 = vmatpush2.bf16.msra.mxu0 0
  %228 = vmatprep.subr.bf16.mxu0 0
  %229 = vmatpush2.bf16.msra.mxu0 0
  %230 = vmatprep.subr.bf16.mxu0 0
  %231 = vmatpush2.bf16.msra.mxu0 0
  %232 = vmatprep.subr.bf16.mxu0 0
  %233 = vmatpush2.bf16.msra.mxu0 0
  %234 = vmatprep.subr.bf16.mxu0 0
  %235 = vmatpush2.bf16.msra.mxu0 0
  %236 = vmatprep.mubr.bf16.mxu0 0
  %237 = vmatmul.mubr.bf16.gmra.mxu0 %v202
  %v238 = vpop.f32.mrf.mxu0
  %v239 = vadd.f32 0.0, %v238
  %v240 = vpop.f32.mrf.mxu0
  %v241 = vpop.f32.mrf.mxu0
  %v242 = vpop.f32.mrf.mxu0
  %243 = vdwg.mxu0
  %v245 = vrot.slane %v239, 6
  %v247 = vadd.f32 %v181, %v245
  %v248 = vmax.f32 %v247, 0.0
  %v249 = vpack.c.bf16 %v248, %v248
  %v251 = vlaneseq
  %v252 = vshrl.u32 %v251, 7
  %v253 = vsub.s32 0, %v252
  %v254 = vrot.slane %v49, %v253
  %v260 = vunpack.c.l.b16 %v43
  %v261 = vunpack.c.l.b16 %v44
  %v262 = vunpack.c.l.b16 %v45
  %v263 = vunpack.c.l.b16 %v46
  %v264 = vpack.c.b16 %v261, %v260
  %v265 = vpack.c.b16 %v263, %v262
  %268 = vmatprep.subr.bf16.mxu0 0
  %269 = vmatpush1.bf16.msra.mxu0 0
  %270 = vmatprep.subr.bf16.mxu0 0
  %271 = vmatpush1.bf16.msra.mxu0 0
  %272 = vmatprep.subr.bf16.mxu0 0
  %273 = vmatpush1.bf16.msra.mxu0 0
  %274 = vmatprep.subr.bf16.mxu0 0
  %275 = vmatpush1.bf16.msra.mxu0 0
  %276 = vmatprep.subr.bf16.mxu0 0
  %277 = vmatpush1.bf16.msra.mxu0 0
  %278 = vmatprep.subr.bf16.mxu0 0
  %279 = vmatpush1.bf16.msra.mxu0 0
  %280 = vmatprep.subr.bf16.mxu0 0
  %281 = vmatpush1.bf16.msra.mxu0 %v265
  %282 = vmatprep.subr.bf16.mxu0 0
  %283 = vmatpush1.bf16.msra.mxu0 %v264
  %284 = vmatprep.subr.bf16.mxu0 0
  %285 = vmatpush2.bf16.msra.mxu0 0
  %286 = vmatprep.subr.bf16.mxu0 0
  %287 = vmatpush2.bf16.msra.mxu0 0
  %288 = vmatprep.subr.bf16.mxu0 0
  %289 = vmatpush2.bf16.msra.mxu0 0
  %290 = vmatprep.subr.bf16.mxu0 0
  %291 = vmatpush2.bf16.msra.mxu0 0
  %292 = vmatprep.subr.bf16.mxu0 0
  %293 = vmatpush2.bf16.msra.mxu0 0
  %294 = vmatprep.subr.bf16.mxu0 0
  %295 = vmatpush2.bf16.msra.mxu0 0
  %296 = vmatprep.subr.bf16.mxu0 0
  %297 = vmatpush2.bf16.msra.mxu0 0
  %298 = vmatprep.subr.bf16.mxu0 0
  %299 = vmatpush2.bf16.msra.mxu0 0
  %300 = vmatprep.mubr.bf16.mxu0 0
  %301 = vmatmul.mubr.bf16.gmra.mxu0 %v202
  %v302 = vpop.f32.mrf.mxu0
  %v303 = vadd.f32 %v254, %v302
  %v304 = vpop.f32.mrf.mxu0
  %v305 = vpop.f32.mrf.mxu0
  %v306 = vpop.f32.mrf.mxu0
  %307 = vdwg.mxu0
  %v308 = vmax.f32 %v303, 0.0
  %v309 = vpack.c.bf16 %v308, %v308
  %v311 = vrot.slane %v249, 1
  %v313 = vsel %vm142, %v311, 0
  %315 = vmatprep.subr.bf16.mxu0 0
  %316 = vmatpush1.bf16.msra.mxu0 0
  %317 = vmatprep.subr.bf16.mxu0 0
  %318 = vmatpush1.bf16.msra.mxu0 0
  %319 = vmatprep.subr.bf16.mxu0 0
  %320 = vmatpush1.bf16.msra.mxu0 0
  %321 = vmatprep.subr.bf16.mxu0 0
  %322 = vmatpush1.bf16.msra.mxu0 0
  %323 = vmatprep.subr.bf16.mxu0 0
  %324 = vmatpush1.bf16.msra.mxu0 0
  %325 = vmatprep.subr.bf16.mxu0 0
  %326 = vmatpush1.bf16.msra.mxu0 0
  %327 = vmatprep.subr.bf16.mxu0 0
  %328 = vmatpush1.bf16.msra.mxu0 %v198
  %329 = vmatprep.subr.bf16.mxu0 0
  %330 = vmatpush1.bf16.msra.mxu0 %v197
  %331 = vmatprep.subr.bf16.mxu0 0
  %332 = vmatpush2.bf16.msra.mxu0 0
  %333 = vmatprep.subr.bf16.mxu0 0
  %334 = vmatpush2.bf16.msra.mxu0 0
  %335 = vmatprep.subr.bf16.mxu0 0
  %336 = vmatpush2.bf16.msra.mxu0 0
  %337 = vmatprep.subr.bf16.mxu0 0
  %338 = vmatpush2.bf16.msra.mxu0 0
  %339 = vmatprep.subr.bf16.mxu0 0
  %340 = vmatpush2.bf16.msra.mxu0 0
  %341 = vmatprep.subr.bf16.mxu0 0
  %342 = vmatpush2.bf16.msra.mxu0 0
  %343 = vmatprep.subr.bf16.mxu0 0
  %344 = vmatpush2.bf16.msra.mxu0 0
  %345 = vmatprep.subr.bf16.mxu0 0
  %346 = vmatpush2.bf16.msra.mxu0 0
  %347 = vmatprep.mubr.bf16.mxu0 0
  %348 = vmatmul.mubr.bf16.gmra.mxu0 %v313
  %v349 = vpop.f32.mrf.mxu0
  %v350 = vadd.f32 0.0, %v349
  %v351 = vpop.f32.mrf.mxu0
  %v352 = vpop.f32.mrf.mxu0
  %v353 = vpop.f32.mrf.mxu0
  %354 = vdwg.mxu0
  %v356 = vrot.slane %v350, 4
  %v358 = vadd.f32 %v181, %v356
  %v359 = vmax.f32 %v358, 0.0
  %v360 = vpack.c.bf16 %v359, %v359
  %361 = vmatprep.subr.bf16.mxu0 0
  %362 = vmatpush1.bf16.msra.mxu0 0
  %363 = vmatprep.subr.bf16.mxu0 0
  %364 = vmatpush1.bf16.msra.mxu0 0
  %365 = vmatprep.subr.bf16.mxu0 0
  %366 = vmatpush1.bf16.msra.mxu0 0
  %367 = vmatprep.subr.bf16.mxu0 0
  %368 = vmatpush1.bf16.msra.mxu0 0
  %369 = vmatprep.subr.bf16.mxu0 0
  %370 = vmatpush1.bf16.msra.mxu0 0
  %371 = vmatprep.subr.bf16.mxu0 0
  %372 = vmatpush1.bf16.msra.mxu0 0
  %373 = vmatprep.subr.bf16.mxu0 0
  %374 = vmatpush1.bf16.msra.mxu0 %v265
  %375 = vmatprep.subr.bf16.mxu0 0
  %376 = vmatpush1.bf16.msra.mxu0 %v264
  %377 = vmatprep.subr.bf16.mxu0 0
  %378 = vmatpush2.bf16.msra.mxu0 0
  %379 = vmatprep.subr.bf16.mxu0 0
  %380 = vmatpush2.bf16.msra.mxu0 0
  %381 = vmatprep.subr.bf16.mxu0 0
  %382 = vmatpush2.bf16.msra.mxu0 0
  %383 = vmatprep.subr.bf16.mxu0 0
  %384 = vmatpush2.bf16.msra.mxu0 0
  %385 = vmatprep.subr.bf16.mxu0 0
  %386 = vmatpush2.bf16.msra.mxu0 0
  %387 = vmatprep.subr.bf16.mxu0 0
  %388 = vmatpush2.bf16.msra.mxu0 0
  %389 = vmatprep.subr.bf16.mxu0 0
  %390 = vmatpush2.bf16.msra.mxu0 0
  %391 = vmatprep.subr.bf16.mxu0 0
  %392 = vmatpush2.bf16.msra.mxu0 0
  %393 = vmatprep.mubr.bf16.mxu0 0
  %394 = vmatmul.mubr.bf16.gmra.mxu0 %v313
  %v395 = vpop.f32.mrf.mxu0
  %v396 = vadd.f32 %v254, %v395
  %v397 = vpop.f32.mrf.mxu0
  %v398 = vpop.f32.mrf.mxu0
  %v399 = vpop.f32.mrf.mxu0
  %400 = vdwg.mxu0
  %v405 = vunpack.c.l.b16 %v35
  %v406 = vunpack.c.l.b16 %v36
  %v407 = vunpack.c.l.b16 %v37
  %v408 = vunpack.c.l.b16 %v38
  %v409 = vpack.c.b16 %v406, %v405
  %v410 = vpack.c.b16 %v408, %v407
  %v414 = vsel %vm142, %v309, 0
  %416 = vmatprep.subr.bf16.mxu0 0
  %417 = vmatpush1.bf16.msra.mxu0 0
  %418 = vmatprep.subr.bf16.mxu0 0
  %419 = vmatpush1.bf16.msra.mxu0 0
  %420 = vmatprep.subr.bf16.mxu0 0
  %421 = vmatpush1.bf16.msra.mxu0 0
  %422 = vmatprep.subr.bf16.mxu0 0
  %423 = vmatpush1.bf16.msra.mxu0 0
  %424 = vmatprep.subr.bf16.mxu0 0
  %425 = vmatpush1.bf16.msra.mxu0 0
  %426 = vmatprep.subr.bf16.mxu0 0
  %427 = vmatpush1.bf16.msra.mxu0 0
  %428 = vmatprep.subr.bf16.mxu0 0
  %429 = vmatpush1.bf16.msra.mxu0 %v410
  %430 = vmatprep.subr.bf16.mxu0 0
  %431 = vmatpush1.bf16.msra.mxu0 %v409
  %432 = vmatprep.subr.bf16.mxu0 0
  %433 = vmatpush2.bf16.msra.mxu0 0
  %434 = vmatprep.subr.bf16.mxu0 0
  %435 = vmatpush2.bf16.msra.mxu0 0
  %436 = vmatprep.subr.bf16.mxu0 0
  %437 = vmatpush2.bf16.msra.mxu0 0
  %438 = vmatprep.subr.bf16.mxu0 0
  %439 = vmatpush2.bf16.msra.mxu0 0
  %440 = vmatprep.subr.bf16.mxu0 0
  %441 = vmatpush2.bf16.msra.mxu0 0
  %442 = vmatprep.subr.bf16.mxu0 0
  %443 = vmatpush2.bf16.msra.mxu0 0
  %444 = vmatprep.subr.bf16.mxu0 0
  %445 = vmatpush2.bf16.msra.mxu0 0
  %446 = vmatprep.subr.bf16.mxu0 0
  %447 = vmatpush2.bf16.msra.mxu0 0
  %448 = vmatprep.mubr.bf16.mxu0 0
  %449 = vmatmul.mubr.bf16.gmra.mxu0 %v414
  %v450 = vpop.f32.mrf.mxu0
  %v451 = vadd.f32 0.0, %v450
  %v452 = vpop.f32.mrf.mxu0
  %v453 = vpop.f32.mrf.mxu0
  %v454 = vpop.f32.mrf.mxu0
  %455 = vdwg.mxu0
  %v456 = vadd.f32 %v396, %v451
  %v457 = vmax.f32 %v456, 0.0
  %v458 = vpack.c.bf16 %v457, %v457
  %v460 = vrot.slane %v360, 2
  %v462 = vsel %vm142, %v460, 0
  %464 = vmatprep.subr.bf16.mxu0 0
  %465 = vmatpush1.bf16.msra.mxu0 0
  %466 = vmatprep.subr.bf16.mxu0 0
  %467 = vmatpush1.bf16.msra.mxu0 0
  %468 = vmatprep.subr.bf16.mxu0 0
  %469 = vmatpush1.bf16.msra.mxu0 0
  %470 = vmatprep.subr.bf16.mxu0 0
  %471 = vmatpush1.bf16.msra.mxu0 0
  %472 = vmatprep.subr.bf16.mxu0 0
  %473 = vmatpush1.bf16.msra.mxu0 0
  %474 = vmatprep.subr.bf16.mxu0 0
  %475 = vmatpush1.bf16.msra.mxu0 0
  %476 = vmatprep.subr.bf16.mxu0 0
  %477 = vmatpush1.bf16.msra.mxu0 %v198
  %478 = vmatprep.subr.bf16.mxu0 0
  %479 = vmatpush1.bf16.msra.mxu0 %v197
  %480 = vmatprep.subr.bf16.mxu0 0
  %481 = vmatpush2.bf16.msra.mxu0 0
  %482 = vmatprep.subr.bf16.mxu0 0
  %483 = vmatpush2.bf16.msra.mxu0 0
  %484 = vmatprep.subr.bf16.mxu0 0
  %485 = vmatpush2.bf16.msra.mxu0 0
  %486 = vmatprep.subr.bf16.mxu0 0
  %487 = vmatpush2.bf16.msra.mxu0 0
  %488 = vmatprep.subr.bf16.mxu0 0
  %489 = vmatpush2.bf16.msra.mxu0 0
  %490 = vmatprep.subr.bf16.mxu0 0
  %491 = vmatpush2.bf16.msra.mxu0 0
  %492 = vmatprep.subr.bf16.mxu0 0
  %493 = vmatpush2.bf16.msra.mxu0 0
  %494 = vmatprep.subr.bf16.mxu0 0
  %495 = vmatpush2.bf16.msra.mxu0 0
  %496 = vmatprep.mubr.bf16.mxu0 0
  %497 = vmatmul.mubr.bf16.gmra.mxu0 %v462
  %v498 = vpop.f32.mrf.mxu0
  %v499 = vadd.f32 0.0, %v498
  %v500 = vpop.f32.mrf.mxu0
  %v501 = vpop.f32.mrf.mxu0
  %v502 = vpop.f32.mrf.mxu0
  %503 = vdwg.mxu0
  %v505 = vrot.slane %v499, 2
  %v507 = vadd.f32 %v181, %v505
  %v508 = vmax.f32 %v507, 0.0
  %v509 = vpack.c.bf16 %v508, %v508
  %510 = vmatprep.subr.bf16.mxu0 0
  %511 = vmatpush1.bf16.msra.mxu0 0
  %512 = vmatprep.subr.bf16.mxu0 0
  %513 = vmatpush1.bf16.msra.mxu0 0
  %514 = vmatprep.subr.bf16.mxu0 0
  %515 = vmatpush1.bf16.msra.mxu0 0
  %516 = vmatprep.subr.bf16.mxu0 0
  %517 = vmatpush1.bf16.msra.mxu0 0
  %518 = vmatprep.subr.bf16.mxu0 0
  %519 = vmatpush1.bf16.msra.mxu0 0
  %520 = vmatprep.subr.bf16.mxu0 0
  %521 = vmatpush1.bf16.msra.mxu0 0
  %522 = vmatprep.subr.bf16.mxu0 0
  %523 = vmatpush1.bf16.msra.mxu0 %v265
  %524 = vmatprep.subr.bf16.mxu0 0
  %525 = vmatpush1.bf16.msra.mxu0 %v264
  %526 = vmatprep.subr.bf16.mxu0 0
  %527 = vmatpush2.bf16.msra.mxu0 0
  %528 = vmatprep.subr.bf16.mxu0 0
  %529 = vmatpush2.bf16.msra.mxu0 0
  %530 = vmatprep.subr.bf16.mxu0 0
  %531 = vmatpush2.bf16.msra.mxu0 0
  %532 = vmatprep.subr.bf16.mxu0 0
  %533 = vmatpush2.bf16.msra.mxu0 0
  %534 = vmatprep.subr.bf16.mxu0 0
  %535 = vmatpush2.bf16.msra.mxu0 0
  %536 = vmatprep.subr.bf16.mxu0 0
  %537 = vmatpush2.bf16.msra.mxu0 0
  %538 = vmatprep.subr.bf16.mxu0 0
  %539 = vmatpush2.bf16.msra.mxu0 0
  %540 = vmatprep.subr.bf16.mxu0 0
  %541 = vmatpush2.bf16.msra.mxu0 0
  %542 = vmatprep.mubr.bf16.mxu0 0
  %543 = vmatmul.mubr.bf16.gmra.mxu0 %v462
  %v544 = vpop.f32.mrf.mxu0
  %v545 = vadd.f32 %v254, %v544
  %v546 = vpop.f32.mrf.mxu0
  %v547 = vpop.f32.mrf.mxu0
  %v548 = vpop.f32.mrf.mxu0
  %549 = vdwg.mxu0
  %v551 = vsel %vm142, %v458, 0
  %553 = vmatprep.subr.bf16.mxu0 0
  %554 = vmatpush1.bf16.msra.mxu0 0
  %555 = vmatprep.subr.bf16.mxu0 0
  %556 = vmatpush1.bf16.msra.mxu0 0
  %557 = vmatprep.subr.bf16.mxu0 0
  %558 = vmatpush1.bf16.msra.mxu0 0
  %559 = vmatprep.subr.bf16.mxu0 0
  %560 = vmatpush1.bf16.msra.mxu0 0
  %561 = vmatprep.subr.bf16.mxu0 0
  %562 = vmatpush1.bf16.msra.mxu0 0
  %563 = vmatprep.subr.bf16.mxu0 0
  %564 = vmatpush1.bf16.msra.mxu0 0
  %565 = vmatprep.subr.bf16.mxu0 0
  %566 = vmatpush1.bf16.msra.mxu0 %v410
  %567 = vmatprep.subr.bf16.mxu0 0
  %568 = vmatpush1.bf16.msra.mxu0 %v409
  %569 = vmatprep.subr.bf16.mxu0 0
  %570 = vmatpush2.bf16.msra.mxu0 0
  %571 = vmatprep.subr.bf16.mxu0 0
  %572 = vmatpush2.bf16.msra.mxu0 0
  %573 = vmatprep.subr.bf16.mxu0 0
  %574 = vmatpush2.bf16.msra.mxu0 0
  %575 = vmatprep.subr.bf16.mxu0 0
  %576 = vmatpush2.bf16.msra.mxu0 0
  %577 = vmatprep.subr.bf16.mxu0 0
  %578 = vmatpush2.bf16.msra.mxu0 0
  %579 = vmatprep.subr.bf16.mxu0 0
  %580 = vmatpush2.bf16.msra.mxu0 0
  %581 = vmatprep.subr.bf16.mxu0 0
  %582 = vmatpush2.bf16.msra.mxu0 0
  %583 = vmatprep.subr.bf16.mxu0 0
  %584 = vmatpush2.bf16.msra.mxu0 0
  %585 = vmatprep.mubr.bf16.mxu0 0
  %586 = vmatmul.mubr.bf16.gmra.mxu0 %v551
  %v587 = vpop.f32.mrf.mxu0
  %v588 = vadd.f32 0.0, %v587
  %v589 = vpop.f32.mrf.mxu0
  %v590 = vpop.f32.mrf.mxu0
  %v591 = vpop.f32.mrf.mxu0
  %592 = vdwg.mxu0
  %v593 = vadd.f32 %v545, %v588
  %v594 = vmax.f32 %v593, 0.0
  %v595 = vpack.c.bf16 %v594, %v594
  %v597 = vrot.slane %v509, 3
  %v599 = vsel %vm142, %v597, 0
  %601 = vmatprep.subr.bf16.mxu0 0
  %602 = vmatpush1.bf16.msra.mxu0 0
  %603 = vmatprep.subr.bf16.mxu0 0
  %604 = vmatpush1.bf16.msra.mxu0 0
  %605 = vmatprep.subr.bf16.mxu0 0
  %606 = vmatpush1.bf16.msra.mxu0 0
  %607 = vmatprep.subr.bf16.mxu0 0
  %608 = vmatpush1.bf16.msra.mxu0 0
  %609 = vmatprep.subr.bf16.mxu0 0
  %610 = vmatpush1.bf16.msra.mxu0 0
  %611 = vmatprep.subr.bf16.mxu0 0
  %612 = vmatpush1.bf16.msra.mxu0 0
  %613 = vmatprep.subr.bf16.mxu0 0
  %614 = vmatpush1.bf16.msra.mxu0 %v198
  %615 = vmatprep.subr.bf16.mxu0 0
  %616 = vmatpush1.bf16.msra.mxu0 %v197
  %617 = vmatprep.subr.bf16.mxu0 0
  %618 = vmatpush2.bf16.msra.mxu0 0
  %619 = vmatprep.subr.bf16.mxu0 0
  %620 = vmatpush2.bf16.msra.mxu0 0
  %621 = vmatprep.subr.bf16.mxu0 0
  %622 = vmatpush2.bf16.msra.mxu0 0
  %623 = vmatprep.subr.bf16.mxu0 0
  %624 = vmatpush2.bf16.msra.mxu0 0
  %625 = vmatprep.subr.bf16.mxu0 0
  %626 = vmatpush2.bf16.msra.mxu0 0
  %627 = vmatprep.subr.bf16.mxu0 0
  %628 = vmatpush2.bf16.msra.mxu0 0
  %629 = vmatprep.subr.bf16.mxu0 0
  %630 = vmatpush2.bf16.msra.mxu0 0
  %631 = vmatprep.subr.bf16.mxu0 0
  %632 = vmatpush2.bf16.msra.mxu0 0
  %633 = vmatprep.mubr.bf16.mxu0 0
  %634 = vmatmul.mubr.bf16.gmra.mxu0 %v599
  %v635 = vpop.f32.mrf.mxu0
  %v636 = vadd.f32 0.0, %v635
  %v637 = vpop.f32.mrf.mxu0
  %v638 = vpop.f32.mrf.mxu0
  %v639 = vpop.f32.mrf.mxu0
  %640 = vdwg.mxu0
  %v641 = vadd.f32 %v184, %v636
  %v642 = vmax.f32 %v641, 0.0
  %v643 = vpack.c.bf16 %v642, %v642
  %644 = vmatprep.subr.bf16.mxu0 0
  %645 = vmatpush1.bf16.msra.mxu0 0
  %646 = vmatprep.subr.bf16.mxu0 0
  %647 = vmatpush1.bf16.msra.mxu0 0
  %648 = vmatprep.subr.bf16.mxu0 0
  %649 = vmatpush1.bf16.msra.mxu0 0
  %650 = vmatprep.subr.bf16.mxu0 0
  %651 = vmatpush1.bf16.msra.mxu0 0
  %652 = vmatprep.subr.bf16.mxu0 0
  %653 = vmatpush1.bf16.msra.mxu0 0
  %654 = vmatprep.subr.bf16.mxu0 0
  %655 = vmatpush1.bf16.msra.mxu0 0
  %656 = vmatprep.subr.bf16.mxu0 0
  %657 = vmatpush1.bf16.msra.mxu0 %v265
  %658 = vmatprep.subr.bf16.mxu0 0
  %659 = vmatpush1.bf16.msra.mxu0 %v264
  %660 = vmatprep.subr.bf16.mxu0 0
  %661 = vmatpush2.bf16.msra.mxu0 0
  %662 = vmatprep.subr.bf16.mxu0 0
  %663 = vmatpush2.bf16.msra.mxu0 0
  %664 = vmatprep.subr.bf16.mxu0 0
  %665 = vmatpush2.bf16.msra.mxu0 0
  %666 = vmatprep.subr.bf16.mxu0 0
  %667 = vmatpush2.bf16.msra.mxu0 0
  %668 = vmatprep.subr.bf16.mxu0 0
  %669 = vmatpush2.bf16.msra.mxu0 0
  %670 = vmatprep.subr.bf16.mxu0 0
  %671 = vmatpush2.bf16.msra.mxu0 0
  %672 = vmatprep.subr.bf16.mxu0 0
  %673 = vmatpush2.bf16.msra.mxu0 0
  %674 = vmatprep.subr.bf16.mxu0 0
  %675 = vmatpush2.bf16.msra.mxu0 0
  %676 = vmatprep.mubr.bf16.mxu0 0
  %677 = vmatmul.mubr.bf16.gmra.mxu0 %v599
  %v678 = vpop.f32.mrf.mxu0
  %v679 = vadd.f32 %v254, %v678
  %v680 = vpop.f32.mrf.mxu0
  %v681 = vpop.f32.mrf.mxu0
  %v682 = vpop.f32.mrf.mxu0
  %683 = vdwg.mxu0
  %v685 = vsel %vm142, %v595, 0
  %687 = vmatprep.subr.bf16.mxu0 0
  %688 = vmatpush1.bf16.msra.mxu0 0
  %689 = vmatprep.subr.bf16.mxu0 0
  %690 = vmatpush1.bf16.msra.mxu0 0
  %691 = vmatprep.subr.bf16.mxu0 0
  %692 = vmatpush1.bf16.msra.mxu0 0
  %693 = vmatprep.subr.bf16.mxu0 0
  %694 = vmatpush1.bf16.msra.mxu0 0
  %695 = vmatprep.subr.bf16.mxu0 0
  %696 = vmatpush1.bf16.msra.mxu0 0
  %697 = vmatprep.subr.bf16.mxu0 0
  %698 = vmatpush1.bf16.msra.mxu0 0
  %699 = vmatprep.subr.bf16.mxu0 0
  %700 = vmatpush1.bf16.msra.mxu0 %v410
  %701 = vmatprep.subr.bf16.mxu0 0
  %702 = vmatpush1.bf16.msra.mxu0 %v409
  %703 = vmatprep.subr.bf16.mxu0 0
  %704 = vmatpush2.bf16.msra.mxu0 0
  %705 = vmatprep.subr.bf16.mxu0 0
  %706 = vmatpush2.bf16.msra.mxu0 0
  %707 = vmatprep.subr.bf16.mxu0 0
  %708 = vmatpush2.bf16.msra.mxu0 0
  %709 = vmatprep.subr.bf16.mxu0 0
  %710 = vmatpush2.bf16.msra.mxu0 0
  %711 = vmatprep.subr.bf16.mxu0 0
  %712 = vmatpush2.bf16.msra.mxu0 0
  %713 = vmatprep.subr.bf16.mxu0 0
  %714 = vmatpush2.bf16.msra.mxu0 0
  %715 = vmatprep.subr.bf16.mxu0 0
  %716 = vmatpush2.bf16.msra.mxu0 0
  %717 = vmatprep.subr.bf16.mxu0 0
  %718 = vmatpush2.bf16.msra.mxu0 0
  %719 = vmatprep.mubr.bf16.mxu0 0
  %720 = vmatmul.mubr.bf16.gmra.mxu0 %v685
  %v721 = vpop.f32.mrf.mxu0
  %v722 = vadd.f32 0.0, %v721
  %v723 = vpop.f32.mrf.mxu0
  %v724 = vpop.f32.mrf.mxu0
  %v725 = vpop.f32.mrf.mxu0
  %726 = vdwg.mxu0
  %v727 = vadd.f32 %v679, %v722
  %v728 = vmax.f32 %v727, 0.0
  %v729 = vpack.c.bf16 %v728, %v728
  %v731 = vsel %vm142, %v643, 0
  %733 = vmatprep.subr.bf16.mxu0 0
  %734 = vmatpush1.bf16.msra.mxu0 0
  %735 = vmatprep.subr.bf16.mxu0 0
  %736 = vmatpush1.bf16.msra.mxu0 0
  %737 = vmatprep.subr.bf16.mxu0 0
  %738 = vmatpush1.bf16.msra.mxu0 0
  %739 = vmatprep.subr.bf16.mxu0 0
  %740 = vmatpush1.bf16.msra.mxu0 0
  %741 = vmatprep.subr.bf16.mxu0 0
  %742 = vmatpush1.bf16.msra.mxu0 0
  %743 = vmatprep.subr.bf16.mxu0 0
  %744 = vmatpush1.bf16.msra.mxu0 0
  %745 = vmatprep.subr.bf16.mxu0 0
  %746 = vmatpush1.bf16.msra.mxu0 %v198
  %747 = vmatprep.subr.bf16.mxu0 0
  %748 = vmatpush1.bf16.msra.mxu0 %v197
  %749 = vmatprep.subr.bf16.mxu0 0
  %750 = vmatpush2.bf16.msra.mxu0 0
  %751 = vmatprep.subr.bf16.mxu0 0
  %752 = vmatpush2.bf16.msra.mxu0 0
  %753 = vmatprep.subr.bf16.mxu0 0
  %754 = vmatpush2.bf16.msra.mxu0 0
  %755 = vmatprep.subr.bf16.mxu0 0
  %756 = vmatpush2.bf16.msra.mxu0 0
  %757 = vmatprep.subr.bf16.mxu0 0
  %758 = vmatpush2.bf16.msra.mxu0 0
  %759 = vmatprep.subr.bf16.mxu0 0
  %760 = vmatpush2.bf16.msra.mxu0 0
  %761 = vmatprep.subr.bf16.mxu0 0
  %762 = vmatpush2.bf16.msra.mxu0 0
  %763 = vmatprep.subr.bf16.mxu0 0
  %764 = vmatpush2.bf16.msra.mxu0 0
  %765 = vmatprep.mubr.bf16.mxu0 0
  %766 = vmatmul.mubr.bf16.gmra.mxu0 %v731
  %v767 = vpop.f32.mrf.mxu0
  %v768 = vadd.f32 0.0, %v767
  %v769 = vpop.f32.mrf.mxu0
  %v770 = vpop.f32.mrf.mxu0
  %v771 = vpop.f32.mrf.mxu0
  %772 = vdwg.mxu0
  %v774 = vrot.slane %v768, 6
  %v776 = vadd.f32 %v184, %v774
  %v777 = vmax.f32 %v776, 0.0
  %v778 = vpack.c.bf16 %v777, %v777
  %779 = vmatprep.subr.bf16.mxu0 0
  %780 = vmatpush1.bf16.msra.mxu0 0
  %781 = vmatprep.subr.bf16.mxu0 0
  %782 = vmatpush1.bf16.msra.mxu0 0
  %783 = vmatprep.subr.bf16.mxu0 0
  %784 = vmatpush1.bf16.msra.mxu0 0
  %785 = vmatprep.subr.bf16.mxu0 0
  %786 = vmatpush1.bf16.msra.mxu0 0
  %787 = vmatprep.subr.bf16.mxu0 0
  %788 = vmatpush1.bf16.msra.mxu0 0
  %789 = vmatprep.subr.bf16.mxu0 0
  %790 = vmatpush1.bf16.msra.mxu0 0
  %791 = vmatprep.subr.bf16.mxu0 0
  %792 = vmatpush1.bf16.msra.mxu0 %v265
  %793 = vmatprep.subr.bf16.mxu0 0
  %794 = vmatpush1.bf16.msra.mxu0 %v264
  %795 = vmatprep.subr.bf16.mxu0 0
  %796 = vmatpush2.bf16.msra.mxu0 0
  %797 = vmatprep.subr.bf16.mxu0 0
  %798 = vmatpush2.bf16.msra.mxu0 0
  %799 = vmatprep.subr.bf16.mxu0 0
  %800 = vmatpush2.bf16.msra.mxu0 0
  %801 = vmatprep.subr.bf16.mxu0 0
  %802 = vmatpush2.bf16.msra.mxu0 0
  %803 = vmatprep.subr.bf16.mxu0 0
  %804 = vmatpush2.bf16.msra.mxu0 0
  %805 = vmatprep.subr.bf16.mxu0 0
  %806 = vmatpush2.bf16.msra.mxu0 0
  %807 = vmatprep.subr.bf16.mxu0 0
  %808 = vmatpush2.bf16.msra.mxu0 0
  %809 = vmatprep.subr.bf16.mxu0 0
  %810 = vmatpush2.bf16.msra.mxu0 0
  %811 = vmatprep.mubr.bf16.mxu0 0
  %812 = vmatmul.mubr.bf16.gmra.mxu0 %v731
  %v813 = vpop.f32.mrf.mxu0
  %v814 = vadd.f32 %v254, %v813
  %v815 = vpop.f32.mrf.mxu0
  %v816 = vpop.f32.mrf.mxu0
  %v817 = vpop.f32.mrf.mxu0
  %818 = vdwg.mxu0
  %v820 = vsel %vm142, %v729, 0
  %822 = vmatprep.subr.bf16.mxu0 0
  %823 = vmatpush1.bf16.msra.mxu0 0
  %824 = vmatprep.subr.bf16.mxu0 0
  %825 = vmatpush1.bf16.msra.mxu0 0
  %826 = vmatprep.subr.bf16.mxu0 0
  %827 = vmatpush1.bf16.msra.mxu0 0
  %828 = vmatprep.subr.bf16.mxu0 0
  %829 = vmatpush1.bf16.msra.mxu0 0
  %830 = vmatprep.subr.bf16.mxu0 0
  %831 = vmatpush1.bf16.msra.mxu0 0
  %832 = vmatprep.subr.bf16.mxu0 0
  %833 = vmatpush1.bf16.msra.mxu0 0
  %834 = vmatprep.subr.bf16.mxu0 0
  %835 = vmatpush1.bf16.msra.mxu0 %v410
  %836 = vmatprep.subr.bf16.mxu0 0
  %837 = vmatpush1.bf16.msra.mxu0 %v409
  %838 = vmatprep.subr.bf16.mxu0 0
  %839 = vmatpush2.bf16.msra.mxu0 0
  %840 = vmatprep.subr.bf16.mxu0 0
  %841 = vmatpush2.bf16.msra.mxu0 0
  %842 = vmatprep.subr.bf16.mxu0 0
  %843 = vmatpush2.bf16.msra.mxu0 0
  %844 = vmatprep.subr.bf16.mxu0 0
  %845 = vmatpush2.bf16.msra.mxu0 0
  %846 = vmatprep.subr.bf16.mxu0 0
  %847 = vmatpush2.bf16.msra.mxu0 0
  %848 = vmatprep.subr.bf16.mxu0 0
  %849 = vmatpush2.bf16.msra.mxu0 0
  %850 = vmatprep.subr.bf16.mxu0 0
  %851 = vmatpush2.bf16.msra.mxu0 0
  %852 = vmatprep.subr.bf16.mxu0 0
  %853 = vmatpush2.bf16.msra.mxu0 0
  %854 = vmatprep.mubr.bf16.mxu0 0
  %855 = vmatmul.mubr.bf16.gmra.mxu0 %v820
  %v856 = vpop.f32.mrf.mxu0
  %v857 = vadd.f32 0.0, %v856
  %v858 = vpop.f32.mrf.mxu0
  %v859 = vpop.f32.mrf.mxu0
  %v860 = vpop.f32.mrf.mxu0
  %861 = vdwg.mxu0
  %v862 = vadd.f32 %v814, %v857
  %v863 = vmax.f32 %v862, 0.0
  %v864 = vpack.c.bf16 %v863, %v863
  %v866 = vrot.slane %v778, 1
  %v868 = vsel %vm142, %v866, 0
  %870 = vmatprep.subr.bf16.mxu0 0
  %871 = vmatpush1.bf16.msra.mxu0 0
  %872 = vmatprep.subr.bf16.mxu0 0
  %873 = vmatpush1.bf16.msra.mxu0 0
  %874 = vmatprep.subr.bf16.mxu0 0
  %875 = vmatpush1.bf16.msra.mxu0 0
  %876 = vmatprep.subr.bf16.mxu0 0
  %877 = vmatpush1.bf16.msra.mxu0 0
  %878 = vmatprep.subr.bf16.mxu0 0
  %879 = vmatpush1.bf16.msra.mxu0 0
  %880 = vmatprep.subr.bf16.mxu0 0
  %881 = vmatpush1.bf16.msra.mxu0 0
  %882 = vmatprep.subr.bf16.mxu0 0
  %883 = vmatpush1.bf16.msra.mxu0 %v198
  %884 = vmatprep.subr.bf16.mxu0 0
  %885 = vmatpush1.bf16.msra.mxu0 %v197
  %886 = vmatprep.subr.bf16.mxu0 0
  %887 = vmatpush2.bf16.msra.mxu0 0
  %888 = vmatprep.subr.bf16.mxu0 0
  %889 = vmatpush2.bf16.msra.mxu0 0
  %890 = vmatprep.subr.bf16.mxu0 0
  %891 = vmatpush2.bf16.msra.mxu0 0
  %892 = vmatprep.subr.bf16.mxu0 0
  %893 = vmatpush2.bf16.msra.mxu0 0
  %894 = vmatprep.subr.bf16.mxu0 0
  %895 = vmatpush2.bf16.msra.mxu0 0
  %896 = vmatprep.subr.bf16.mxu0 0
  %897 = vmatpush2.bf16.msra.mxu0 0
  %898 = vmatprep.subr.bf16.mxu0 0
  %899 = vmatpush2.bf16.msra.mxu0 0
  %900 = vmatprep.subr.bf16.mxu0 0
  %901 = vmatpush2.bf16.msra.mxu0 0
  %902 = vmatprep.mubr.bf16.mxu0 0
  %903 = vmatmul.mubr.bf16.gmra.mxu0 %v868
  %v904 = vpop.f32.mrf.mxu0
  %v905 = vadd.f32 0.0, %v904
  %v906 = vpop.f32.mrf.mxu0
  %v907 = vpop.f32.mrf.mxu0
  %v908 = vpop.f32.mrf.mxu0
  %909 = vdwg.mxu0
  %v911 = vrot.slane %v905, 4
  %v913 = vadd.f32 %v184, %v911
  %v914 = vmax.f32 %v913, 0.0
  %v915 = vpack.c.bf16 %v914, %v914
  %916 = vmatprep.subr.bf16.mxu0 0
  %917 = vmatpush1.bf16.msra.mxu0 0
  %918 = vmatprep.subr.bf16.mxu0 0
  %919 = vmatpush1.bf16.msra.mxu0 0
  %920 = vmatprep.subr.bf16.mxu0 0
  %921 = vmatpush1.bf16.msra.mxu0 0
  %922 = vmatprep.subr.bf16.mxu0 0
  %923 = vmatpush1.bf16.msra.mxu0 0
  %924 = vmatprep.subr.bf16.mxu0 0
  %925 = vmatpush1.bf16.msra.mxu0 0
  %926 = vmatprep.subr.bf16.mxu0 0
  %927 = vmatpush1.bf16.msra.mxu0 0
  %928 = vmatprep.subr.bf16.mxu0 0
  %929 = vmatpush1.bf16.msra.mxu0 %v265
  %930 = vmatprep.subr.bf16.mxu0 0
  %931 = vmatpush1.bf16.msra.mxu0 %v264
  %932 = vmatprep.subr.bf16.mxu0 0
  %933 = vmatpush2.bf16.msra.mxu0 0
  %934 = vmatprep.subr.bf16.mxu0 0
  %935 = vmatpush2.bf16.msra.mxu0 0
  %936 = vmatprep.subr.bf16.mxu0 0
  %937 = vmatpush2.bf16.msra.mxu0 0
  %938 = vmatprep.subr.bf16.mxu0 0
  %939 = vmatpush2.bf16.msra.mxu0 0
  %940 = vmatprep.subr.bf16.mxu0 0
  %941 = vmatpush2.bf16.msra.mxu0 0
  %942 = vmatprep.subr.bf16.mxu0 0
  %943 = vmatpush2.bf16.msra.mxu0 0
  %944 = vmatprep.subr.bf16.mxu0 0
  %945 = vmatpush2.bf16.msra.mxu0 0
  %946 = vmatprep.subr.bf16.mxu0 0
  %947 = vmatpush2.bf16.msra.mxu0 0
  %948 = vmatprep.mubr.bf16.mxu0 0
  %949 = vmatmul.mubr.bf16.gmra.mxu0 %v868
  %v950 = vpop.f32.mrf.mxu0
  %v951 = vadd.f32 %v254, %v950
  %v952 = vpop.f32.mrf.mxu0
  %v953 = vpop.f32.mrf.mxu0
  %v954 = vpop.f32.mrf.mxu0
  %955 = vdwg.mxu0
  %v957 = vsel %vm142, %v864, 0
  %959 = vmatprep.subr.bf16.mxu0 0
  %960 = vmatpush1.bf16.msra.mxu0 0
  %961 = vmatprep.subr.bf16.mxu0 0
  %962 = vmatpush1.bf16.msra.mxu0 0
  %963 = vmatprep.subr.bf16.mxu0 0
  %964 = vmatpush1.bf16.msra.mxu0 0
  %965 = vmatprep.subr.bf16.mxu0 0
  %966 = vmatpush1.bf16.msra.mxu0 0
  %967 = vmatprep.subr.bf16.mxu0 0
  %968 = vmatpush1.bf16.msra.mxu0 0
  %969 = vmatprep.subr.bf16.mxu0 0
  %970 = vmatpush1.bf16.msra.mxu0 0
  %971 = vmatprep.subr.bf16.mxu0 0
  %972 = vmatpush1.bf16.msra.mxu0 %v410
  %973 = vmatprep.subr.bf16.mxu0 0
  %974 = vmatpush1.bf16.msra.mxu0 %v409
  %975 = vmatprep.subr.bf16.mxu0 0
  %976 = vmatpush2.bf16.msra.mxu0 0
  %977 = vmatprep.subr.bf16.mxu0 0
  %978 = vmatpush2.bf16.msra.mxu0 0
  %979 = vmatprep.subr.bf16.mxu0 0
  %980 = vmatpush2.bf16.msra.mxu0 0
  %981 = vmatprep.subr.bf16.mxu0 0
  %982 = vmatpush2.bf16.msra.mxu0 0
  %983 = vmatprep.subr.bf16.mxu0 0
  %984 = vmatpush2.bf16.msra.mxu0 0
  %985 = vmatprep.subr.bf16.mxu0 0
  %986 = vmatpush2.bf16.msra.mxu0 0
  %987 = vmatprep.subr.bf16.mxu0 0
  %988 = vmatpush2.bf16.msra.mxu0 0
  %989 = vmatprep.subr.bf16.mxu0 0
  %990 = vmatpush2.bf16.msra.mxu0 0
  %991 = vmatprep.mubr.bf16.mxu0 0
  %992 = vmatmul.mubr.bf16.gmra.mxu0 %v957
  %v993 = vpop.f32.mrf.mxu0
  %v994 = vadd.f32 0.0, %v993
  %v995 = vpop.f32.mrf.mxu0
  %v996 = vpop.f32.mrf.mxu0
  %v997 = vpop.f32.mrf.mxu0
  %998 = vdwg.mxu0
  %v999 = vadd.f32 %v951, %v994
  %v1000 = vmax.f32 %v999, 0.0
  %v1001 = vpack.c.bf16 %v1000, %v1000
  %v1003 = vrot.slane %v915, 2
  %v1005 = vsel %vm142, %v1003, 0
  %1007 = vmatprep.subr.bf16.mxu0 0
  %1008 = vmatpush1.bf16.msra.mxu0 0
  %1009 = vmatprep.subr.bf16.mxu0 0
  %1010 = vmatpush1.bf16.msra.mxu0 0
  %1011 = vmatprep.subr.bf16.mxu0 0
  %1012 = vmatpush1.bf16.msra.mxu0 0
  %1013 = vmatprep.subr.bf16.mxu0 0
  %1014 = vmatpush1.bf16.msra.mxu0 0
  %1015 = vmatprep.subr.bf16.mxu0 0
  %1016 = vmatpush1.bf16.msra.mxu0 0
  %1017 = vmatprep.subr.bf16.mxu0 0
  %1018 = vmatpush1.bf16.msra.mxu0 0
  %1019 = vmatprep.subr.bf16.mxu0 0
  %1020 = vmatpush1.bf16.msra.mxu0 %v198
  %1021 = vmatprep.subr.bf16.mxu0 0
  %1022 = vmatpush1.bf16.msra.mxu0 %v197
  %1023 = vmatprep.subr.bf16.mxu0 0
  %1024 = vmatpush2.bf16.msra.mxu0 0
  %1025 = vmatprep.subr.bf16.mxu0 0
  %1026 = vmatpush2.bf16.msra.mxu0 0
  %1027 = vmatprep.subr.bf16.mxu0 0
  %1028 = vmatpush2.bf16.msra.mxu0 0
  %1029 = vmatprep.subr.bf16.mxu0 0
  %1030 = vmatpush2.bf16.msra.mxu0 0
  %1031 = vmatprep.subr.bf16.mxu0 0
  %1032 = vmatpush2.bf16.msra.mxu0 0
  %1033 = vmatprep.subr.bf16.mxu0 0
  %1034 = vmatpush2.bf16.msra.mxu0 0
  %1035 = vmatprep.subr.bf16.mxu0 0
  %1036 = vmatpush2.bf16.msra.mxu0 0
  %1037 = vmatprep.subr.bf16.mxu0 0
  %1038 = vmatpush2.bf16.msra.mxu0 0
  %1039 = vmatprep.mubr.bf16.mxu0 0
  %1040 = vmatmul.mubr.bf16.gmra.mxu0 %v1005
  %v1041 = vpop.f32.mrf.mxu0
  %v1042 = vadd.f32 0.0, %v1041
  %v1043 = vpop.f32.mrf.mxu0
  %v1044 = vpop.f32.mrf.mxu0
  %v1045 = vpop.f32.mrf.mxu0
  %1046 = vdwg.mxu0
  %v1048 = vrot.slane %v1042, 2
  %v1050 = vadd.f32 %v184, %v1048
  %v1051 = vmax.f32 %v1050, 0.0
  %v1052 = vpack.c.bf16 %v1051, %v1051
  %1053 = vmatprep.subr.bf16.mxu0 0
  %1054 = vmatpush1.bf16.msra.mxu0 0
  %1055 = vmatprep.subr.bf16.mxu0 0
  %1056 = vmatpush1.bf16.msra.mxu0 0
  %1057 = vmatprep.subr.bf16.mxu0 0
  %1058 = vmatpush1.bf16.msra.mxu0 0
  %1059 = vmatprep.subr.bf16.mxu0 0
  %1060 = vmatpush1.bf16.msra.mxu0 0
  %1061 = vmatprep.subr.bf16.mxu0 0
  %1062 = vmatpush1.bf16.msra.mxu0 0
  %1063 = vmatprep.subr.bf16.mxu0 0
  %1064 = vmatpush1.bf16.msra.mxu0 0
  %1065 = vmatprep.subr.bf16.mxu0 0
  %1066 = vmatpush1.bf16.msra.mxu0 %v265
  %1067 = vmatprep.subr.bf16.mxu0 0
  %1068 = vmatpush1.bf16.msra.mxu0 %v264
  %1069 = vmatprep.subr.bf16.mxu0 0
  %1070 = vmatpush2.bf16.msra.mxu0 0
  %1071 = vmatprep.subr.bf16.mxu0 0
  %1072 = vmatpush2.bf16.msra.mxu0 0
  %1073 = vmatprep.subr.bf16.mxu0 0
  %1074 = vmatpush2.bf16.msra.mxu0 0
  %1075 = vmatprep.subr.bf16.mxu0 0
  %1076 = vmatpush2.bf16.msra.mxu0 0
  %1077 = vmatprep.subr.bf16.mxu0 0
  %1078 = vmatpush2.bf16.msra.mxu0 0
  %1079 = vmatprep.subr.bf16.mxu0 0
  %1080 = vmatpush2.bf16.msra.mxu0 0
  %1081 = vmatprep.subr.bf16.mxu0 0
  %1082 = vmatpush2.bf16.msra.mxu0 0
  %1083 = vmatprep.subr.bf16.mxu0 0
  %1084 = vmatpush2.bf16.msra.mxu0 0
  %1085 = vmatprep.mubr.bf16.mxu0 0
  %1086 = vmatmul.mubr.bf16.gmra.mxu0 %v1005
  %v1087 = vpop.f32.mrf.mxu0
  %v1088 = vadd.f32 %v254, %v1087
  %v1089 = vpop.f32.mrf.mxu0
  %v1090 = vpop.f32.mrf.mxu0
  %v1091 = vpop.f32.mrf.mxu0
  %1092 = vdwg.mxu0
  %v1094 = vsel %vm142, %v1001, 0
  %1096 = vmatprep.subr.bf16.mxu0 0
  %1097 = vmatpush1.bf16.msra.mxu0 0
  %1098 = vmatprep.subr.bf16.mxu0 0
  %1099 = vmatpush1.bf16.msra.mxu0 0
  %1100 = vmatprep.subr.bf16.mxu0 0
  %1101 = vmatpush1.bf16.msra.mxu0 0
  %1102 = vmatprep.subr.bf16.mxu0 0
  %1103 = vmatpush1.bf16.msra.mxu0 0
  %1104 = vmatprep.subr.bf16.mxu0 0
  %1105 = vmatpush1.bf16.msra.mxu0 0
  %1106 = vmatprep.subr.bf16.mxu0 0
  %1107 = vmatpush1.bf16.msra.mxu0 0
  %1108 = vmatprep.subr.bf16.mxu0 0
  %1109 = vmatpush1.bf16.msra.mxu0 %v410
  %1110 = vmatprep.subr.bf16.mxu0 0
  %1111 = vmatpush1.bf16.msra.mxu0 %v409
  %1112 = vmatprep.subr.bf16.mxu0 0
  %1113 = vmatpush2.bf16.msra.mxu0 0
  %1114 = vmatprep.subr.bf16.mxu0 0
  %1115 = vmatpush2.bf16.msra.mxu0 0
  %1116 = vmatprep.subr.bf16.mxu0 0
  %1117 = vmatpush2.bf16.msra.mxu0 0
  %1118 = vmatprep.subr.bf16.mxu0 0
  %1119 = vmatpush2.bf16.msra.mxu0 0
  %1120 = vmatprep.subr.bf16.mxu0 0
  %1121 = vmatpush2.bf16.msra.mxu0 0
  %1122 = vmatprep.subr.bf16.mxu0 0
  %1123 = vmatpush2.bf16.msra.mxu0 0
  %1124 = vmatprep.subr.bf16.mxu0 0
  %1125 = vmatpush2.bf16.msra.mxu0 0
  %1126 = vmatprep.subr.bf16.mxu0 0
  %1127 = vmatpush2.bf16.msra.mxu0 0
  %1128 = vmatprep.mubr.bf16.mxu0 0
  %1129 = vmatmul.mubr.bf16.gmra.mxu0 %v1094
  %v1130 = vpop.f32.mrf.mxu0
  %v1131 = vadd.f32 0.0, %v1130
  %v1132 = vpop.f32.mrf.mxu0
  %v1133 = vpop.f32.mrf.mxu0
  %v1134 = vpop.f32.mrf.mxu0
  %1135 = vdwg.mxu0
  %v1136 = vadd.f32 %v1088, %v1131
  %v1137 = vmax.f32 %v1136, 0.0
  %v1138 = vpack.c.bf16 %v1137, %v1137
  %v1140 = vrot.slane %v1052, 3
  %v1142 = vsel %vm142, %v1140, 0
  %1144 = vmatprep.subr.bf16.mxu0 0
  %1145 = vmatpush1.bf16.msra.mxu0 0
  %1146 = vmatprep.subr.bf16.mxu0 0
  %1147 = vmatpush1.bf16.msra.mxu0 0
  %1148 = vmatprep.subr.bf16.mxu0 0
  %1149 = vmatpush1.bf16.msra.mxu0 0
  %1150 = vmatprep.subr.bf16.mxu0 0
  %1151 = vmatpush1.bf16.msra.mxu0 0
  %1152 = vmatprep.subr.bf16.mxu0 0
  %1153 = vmatpush1.bf16.msra.mxu0 0
  %1154 = vmatprep.subr.bf16.mxu0 0
  %1155 = vmatpush1.bf16.msra.mxu0 0
  %1156 = vmatprep.subr.bf16.mxu0 0
  %1157 = vmatpush1.bf16.msra.mxu0 %v265
  %1158 = vmatprep.subr.bf16.mxu0 0
  %1159 = vmatpush1.bf16.msra.mxu0 %v264
  %1160 = vmatprep.subr.bf16.mxu0 0
  %1161 = vmatpush2.bf16.msra.mxu0 0
  %1162 = vmatprep.subr.bf16.mxu0 0
  %1163 = vmatpush2.bf16.msra.mxu0 0
  %1164 = vmatprep.subr.bf16.mxu0 0
  %1165 = vmatpush2.bf16.msra.mxu0 0
  %1166 = vmatprep.subr.bf16.mxu0 0
  %1167 = vmatpush2.bf16.msra.mxu0 0
  %1168 = vmatprep.subr.bf16.mxu0 0
  %1169 = vmatpush2.bf16.msra.mxu0 0
  %1170 = vmatprep.subr.bf16.mxu0 0
  %1171 = vmatpush2.bf16.msra.mxu0 0
  %1172 = vmatprep.subr.bf16.mxu0 0
  %1173 = vmatpush2.bf16.msra.mxu0 0
  %1174 = vmatprep.subr.bf16.mxu0 0
  %1175 = vmatpush2.bf16.msra.mxu0 0
  %1176 = vmatprep.mubr.bf16.mxu0 0
  %1177 = vmatmul.mubr.bf16.gmra.mxu0 %v1142
  %v1178 = vpop.f32.mrf.mxu0
  %v1179 = vadd.f32 %v254, %v1178
  %v1180 = vpop.f32.mrf.mxu0
  %v1181 = vpop.f32.mrf.mxu0
  %v1182 = vpop.f32.mrf.mxu0
  %1183 = vdwg.mxu0
  %v1185 = vsel %vm142, %v1138, 0
  %1187 = vmatprep.subr.bf16.mxu0 0
  %1188 = vmatpush1.bf16.msra.mxu0 0
  %1189 = vmatprep.subr.bf16.mxu0 0
  %1190 = vmatpush1.bf16.msra.mxu0 0
  %1191 = vmatprep.subr.bf16.mxu0 0
  %1192 = vmatpush1.bf16.msra.mxu0 0
  %1193 = vmatprep.subr.bf16.mxu0 0
  %1194 = vmatpush1.bf16.msra.mxu0 0
  %1195 = vmatprep.subr.bf16.mxu0 0
  %1196 = vmatpush1.bf16.msra.mxu0 0
  %1197 = vmatprep.subr.bf16.mxu0 0
  %1198 = vmatpush1.bf16.msra.mxu0 0
  %1199 = vmatprep.subr.bf16.mxu0 0
  %1200 = vmatpush1.bf16.msra.mxu0 %v410
  %1201 = vmatprep.subr.bf16.mxu0 0
  %1202 = vmatpush1.bf16.msra.mxu0 %v409
  %1203 = vmatprep.subr.bf16.mxu0 0
  %1204 = vmatpush2.bf16.msra.mxu0 0
  %1205 = vmatprep.subr.bf16.mxu0 0
  %1206 = vmatpush2.bf16.msra.mxu0 0
  %1207 = vmatprep.subr.bf16.mxu0 0
  %1208 = vmatpush2.bf16.msra.mxu0 0
  %1209 = vmatprep.subr.bf16.mxu0 0
  %1210 = vmatpush2.bf16.msra.mxu0 0
  %1211 = vmatprep.subr.bf16.mxu0 0
  %1212 = vmatpush2.bf16.msra.mxu0 0
  %1213 = vmatprep.subr.bf16.mxu0 0
  %1214 = vmatpush2.bf16.msra.mxu0 0
  %1215 = vmatprep.subr.bf16.mxu0 0
  %1216 = vmatpush2.bf16.msra.mxu0 0
  %1217 = vmatprep.subr.bf16.mxu0 0
  %1218 = vmatpush2.bf16.msra.mxu0 0
  %1219 = vmatprep.mubr.bf16.mxu0 0
  %1220 = vmatmul.mubr.bf16.gmra.mxu0 %v1185
  %v1221 = vpop.f32.mrf.mxu0
  %v1222 = vadd.f32 0.0, %v1221
  %v1223 = vpop.f32.mrf.mxu0
  %v1224 = vpop.f32.mrf.mxu0
  %v1225 = vpop.f32.mrf.mxu0
  %1226 = vdwg.mxu0
  %v1227 = vadd.f32 %v1179, %v1222
  %v1228 = vmax.f32 %v1227, 0.0
  %v1229 = vpack.c.bf16 %v1228, %v1228
  %v1231 = vrot.slane %v458, 7
  %v1233 = vrot.slane %v595, 6
  %v1235 = vrot.slane %v729, 5
  %v1237 = vrot.slane %v864, 4
  %v1239 = vrot.slane %v1001, 3
  %v1241 = vrot.slane %v1138, 2
  %v1243 = vrot.slane %v1229, 1
  %vm1244 = vcmask 1040384
  %v1246 = vsel %vm1244, %v309, %v1231
  %vm1247 = vcmask 1041408
  %v1249 = vsel %vm1247, %v1246, %v1233
  %vm1250 = vcmask 1042432
  %v1252 = vsel %vm1250, %v1249, %v1235
  %vm1253 = vcmask 1043456
  %v1255 = vsel %vm1253, %v1252, %v1237
  %v1257 = vsel %vm78, %v1255, %v1239
  %vm1258 = vcmask 1045504
  %v1260 = vsel %vm1258, %v1257, %v1241
  %vm1261 = vcmask 1046528
  %v1263 = vsel %vm1261, %v1260, %v1243
  %v1264 = vld [vmem:[%s6] sm:$0xf]
  %v1265 = vld [vmem:[%s6 + $0x4] sm:$0xf]
  %v1266 = vld [vmem:[%s6 + $0x8] sm:$0xf]
  %v1267 = vld [vmem:[%s6 + $0xc] sm:$0xf]
  %v1268 = vld [vmem:[%s7] sm:$0x1]
  %v1270 = vlaneseq
  %v1271 = vshrl.u32 %v1270, 7
  %v1272 = vsub.s32 0, %v1271
  %v1273 = vrot.slane %v1268, %v1272
  %v1279 = vunpack.c.l.b16 %v1264
  %v1280 = vunpack.c.l.b16 %v1265
  %v1281 = vunpack.c.l.b16 %v1266
  %v1282 = vunpack.c.l.b16 %v1267
  %v1283 = vpack.c.b16 %v1280, %v1279
  %v1284 = vpack.c.b16 %v1282, %v1281
  %v1287 = vsel %vm142, %v1263, 0
  %1289 = vmatprep.subr.bf16.mxu0 0
  %1290 = vmatpush1.bf16.msra.mxu0 0
  %1291 = vmatprep.subr.bf16.mxu0 0
  %1292 = vmatpush1.bf16.msra.mxu0 0
  %1293 = vmatprep.subr.bf16.mxu0 0
  %1294 = vmatpush1.bf16.msra.mxu0 0
  %1295 = vmatprep.subr.bf16.mxu0 0
  %1296 = vmatpush1.bf16.msra.mxu0 0
  %1297 = vmatprep.subr.bf16.mxu0 0
  %1298 = vmatpush1.bf16.msra.mxu0 0
  %1299 = vmatprep.subr.bf16.mxu0 0
  %1300 = vmatpush1.bf16.msra.mxu0 0
  %1301 = vmatprep.subr.bf16.mxu0 0
  %1302 = vmatpush1.bf16.msra.mxu0 %v1284
  %1303 = vmatprep.subr.bf16.mxu0 0
  %1304 = vmatpush1.bf16.msra.mxu0 %v1283
  %1305 = vmatprep.subr.bf16.mxu0 0
  %1306 = vmatpush2.bf16.msra.mxu0 0
  %1307 = vmatprep.subr.bf16.mxu0 0
  %1308 = vmatpush2.bf16.msra.mxu0 0
  %1309 = vmatprep.subr.bf16.mxu0 0
  %1310 = vmatpush2.bf16.msra.mxu0 0
  %1311 = vmatprep.subr.bf16.mxu0 0
  %1312 = vmatpush2.bf16.msra.mxu0 0
  %1313 = vmatprep.subr.bf16.mxu0 0
  %1314 = vmatpush2.bf16.msra.mxu0 0
  %1315 = vmatprep.subr.bf16.mxu0 0
  %1316 = vmatpush2.bf16.msra.mxu0 0
  %1317 = vmatprep.subr.bf16.mxu0 0
  %1318 = vmatpush2.bf16.msra.mxu0 0
  %1319 = vmatprep.subr.bf16.mxu0 0
  %1320 = vmatpush2.bf16.msra.mxu0 0
  %1321 = vmatprep.mubr.bf16.mxu0 0
  %1322 = vmatmul.mubr.bf16.gmra.mxu0 %v1287
  %v1323 = vpop.f32.mrf.mxu0
  %v1324 = vadd.f32 %v1273, %v1323
  %v1325 = vpop.f32.mrf.mxu0
  %v1326 = vpop.f32.mrf.mxu0
  %v1327 = vadd.f32 %v1273, %v1326
  %v1328 = vpop.f32.mrf.mxu0
  %1329 = vdwg.mxu0
  %v1331 = vrot.slane %v1324, 1
  %v1333 = vrot.slane %v1324, 2
  %v1335 = vrot.slane %v1324, 3
  %v1338 = vrot.slane %v1327, 4
  %v1340 = vrot.slane %v1327, 5
  %v1342 = vrot.slane %v1327, 6
  %v1344 = vrot.slane %v1327, 7
  %v1346 = vrot.slane %v1324, 4
  %v1348 = vsel %vm1244, %v1324, %v1331
  %v1349 = vsel %vm1247, %v1348, %v1333
  %v1350 = vsel %vm1250, %v1349, %v1335
  %v1351 = vsel %vm1253, %v1350, %v1338
  %v1352 = vsel %vm78, %v1351, %v1340
  %v1353 = vsel %vm1258, %v1352, %v1342
  %v1354 = vsel %vm1261, %v1353, %v1344
  %v1355 = vsel %vm1244, %v1331, %v1333
  %v1356 = vsel %vm1247, %v1355, %v1335
  %v1357 = vsel %vm1250, %v1356, %v1346
  %v1358 = vsel %vm1253, %v1357, %v1340
  %v1359 = vsel %vm78, %v1358, %v1342
  %v1360 = vsel %vm1258, %v1359, %v1344
  %v1361 = vsel %vm1261, %v1360, %v1327
  %vm1362 = vcmask 15360
  %1363 = vst.msk [vmem:[%s8] sm:$0xff] %vm1362, %v1354
  %1364 = vst.msk [vmem:[%s8 + $0x8] sm:$0xff] %vm1362, %v1361
  // Predicated region
  $region34: #{torch_model_forward.1} parent=0 // pred_check
    _
  $region35: #{torch_model_forward.1} parent=0 // pred_check_branch
    %1366 = sbr.rel (0) target = $region37
  $region36: #{torch_model_forward.1} parent=0 // pred_region
    _
  $region37: #{torch_model_forward.1} parent=0 // pred_fallthru
    _
  // Predicated region
  $region38: #{torch_model_forward.1} parent=0 // pred_check
    _
  $region39: #{torch_model_forward.1} parent=0 // pred_check_branch
    %1368 = sbr.rel (0) target = $region41
  $region40: #{torch_model_forward.1} parent=0 // pred_region
    _
  $region41: #{torch_model_forward.1} parent=0 // pred_fallthru
    _

</llo_original>
